<compile_context>
chip_gen: v7x
topology: tpu7x:2x2x1
jax: 0.10.0
libtpu: 0.0.40
codegen_flags: <defaults>
</compile_context>

<pallas_src>
import jax
import jax.numpy as jnp
from jax.experimental import pallas as pl
from jax.experimental.pallas import tpu as pltpu

_LANES = 128        # lane width / per-layer output segment width
_BLOCK_ROWS = 128   # rows per weight block in the slab (full MXU tile height)


def _pad8(n):
    return -(-n // 8) * 8


def pack_params(params):
    """Pack the 22 per-layer tensors into one bf16 weight slab + one f32 bias slab.

    Each of the 12 dense ops gets a full (128, 128) weight block (zero padded)
    and one 128-lane bias row, so every in-kernel matmul / bias add / store is
    tile-aligned. The fusion Linear(2*h2, h2) is split into its load / weather
    row halves (two dots summed in-kernel), avoiding any lane concatenation.
    """
    (wle1, ble1, wle2, ble2,
     wwe1, bwe1, wwe2, bwe2,
     wf, bf, wmu, bmu, wlv, blv,
     wd1, bd1, wd2, bd2,
     wld, bld, wwd, bwd) = params

    h2 = wf.shape[1]
    weights = [
        wle1, wwe1,            # 0,1  encoder layer 1 (load / weather)
        wle2, wwe2,            # 2,3  encoder layer 2
        wf[:h2, :], wf[h2:, :],  # 4,5  fusion split into load / weather halves
        wmu, wlv,              # 6,7  latent heads
        wd1, wd2,              # 8,9  shared decoder
        wld, wwd,              # 10,11 reconstruction heads
    ]
    biases = [
        ble1, bwe1, ble2, bwe2,
        bf, jnp.zeros_like(bf),     # fusion bias lives on block 4 only
        bmu, blv, bd1, bd2, bld, bwd,
    ]

    n = len(weights)
    w_slab = jnp.zeros((n * _BLOCK_ROWS, _LANES), jnp.float32)
    for i, w in enumerate(weights):
        rin, cout = w.shape
        assert rin <= _BLOCK_ROWS and cout <= _LANES
        w_slab = w_slab.at[i * _BLOCK_ROWS:i * _BLOCK_ROWS + rin, :cout].set(w)
    # bf16 weights: halve DMA bytes / VMEM residency, native MXU rate on
    # v6e/v7x. Accumulation stays f32 (preferred_element_type in the kernel).
    w_slab = w_slab.astype(jnp.bfloat16)

    b_slab = jnp.zeros((_pad8(n), _LANES), jnp.float32)
    for i, b in enumerate(biases):
        b_slab = b_slab.at[i, :b.shape[1]].set(b[0])
    return w_slab, b_slab


def _make_kernel(load_dim, weather_dim):
    def kernel(load_ref, weather_ref, eps_ref, w_ref, b_ref, out_ref):
        def dense(h, idx, k=_LANES, relu=False, extra=None):
            r0 = idx * _BLOCK_ROWS
            w = w_ref[r0:r0 + k, :]                       # static, tile-aligned slice
            y = jnp.dot(h.astype(jnp.bfloat16), w,
                        preferred_element_type=jnp.float32)
            if extra is not None:
                y = y + extra
            y = y + b_ref[idx:idx + 1, :]                 # (1, 128) bias row
            return jnp.maximum(y, 0.0) if relu else y

        # --- per-modality encoders (dropout = identity in eval) ---
        hl = dense(load_ref[...], 0, k=load_dim, relu=True)
        hw = dense(weather_ref[...], 1, k=weather_dim, relu=True)
        hl = dense(hl, 2, relu=True)
        hw = dense(hw, 3, relu=True)

        # --- fusion: concat([lf, wf]) @ Wf  ==  lf @ Wf_top + wf @ Wf_bot ---
        pre = dense(hl, 4)                 # + fusion bias (row 4)
        h = jnp.maximum(dense(hw, 5, extra=pre), 0.0)

        # --- latent heads (each lane-aligned at offset 0 of its segment) ---
        mu = dense(h, 6)                   # zeros beyond latent_dim lanes
        logvar = dense(h, 7)

        # --- reparameterize: z = mu + eps * exp(0.5 * logvar) ---
        # eps is zero-padded beyond latent_dim, so padded lanes of z stay 0.
        z = mu + eps_ref[...] * jnp.exp(0.5 * logvar)

        # --- shared decoder + reconstruction heads ---
        d = dense(z, 8, relu=True)
        d = dense(d, 9, relu=True)
        recon_load = dense(d, 10)
        recon_weather = dense(d, 11)

        # Packed output: four 128-lane-aligned segments -> unmasked full stores.
        out_ref[:, 0 * _LANES:1 * _LANES] = mu
        out_ref[:, 1 * _LANES:2 * _LANES] = logvar
        out_ref[:, 2 * _LANES:3 * _LANES] = recon_load
        out_ref[:, 3 * _LANES:4 * _LANES] = recon_weather

    return kernel


def multimodal_vae_forward(load, weather, eps, params, *, tile_b=None):
    """Fused VAE forward pass: one Pallas kernel, batch-tiled grid."""
    B, load_dim = load.shape
    weather_dim = weather.shape[1]
    latent_dim = eps.shape[1]
    h1 = params[0].shape[1]
    h2 = params[2].shape[1]
    for name, d in (("load_dim", load_dim), ("weather_dim", weather_dim),
                    ("latent_dim", latent_dim), ("h1", h1), ("h2", h2)):
        # TODO(synk): multi-tile N/K packing for layer widths > 128.
        assert d <= _LANES, f"{name}={d} exceeds single-lane-tile packing (128)"

    w_slab, b_slab = pack_params(params)

    # Batch tile: ~256 rows fills the v6e/v7x MXU (use ~128 on v5e); clamp for
    # tiny batches. Per-step VMEM stays far under v7x's 64 MiB.
    if tile_b is None:
        tile_b = 256 if B >= 256 else _pad8(B)
    tile_b = max(8, _pad8(tile_b))
    nb = pl.cdiv(B, tile_b)
    Bp = nb * tile_b

    # Pad batch to a whole number of tiles; pad eps lanes to 128 (tiny arrays,
    # keeps every in-kernel access tile-aligned; padded rows are discarded).
    eps_p = jnp.zeros((Bp, _LANES), jnp.float32).at[:B, :latent_dim].set(eps)
    if Bp != B:
        load_p = jnp.zeros((Bp, load_dim), load.dtype).at[:B].set(load)
        weather_p = jnp.zeros((Bp, weather_dim), weather.dtype).at[:B].set(weather)
    else:
        load_p, weather_p = load, weather

    out_w = 4 * _LANES
    layer_dims = [(load_dim, h1), (weather_dim, h1), (h1, h2), (h1, h2),
                  (h2, h2), (h2, h2), (h2, latent_dim), (h2, latent_dim),
                  (latent_dim, h2), (h2, h1), (h1, load_dim), (h1, weather_dim)]
    flops = 2 * Bp * sum(k * n for k, n in layer_dims)
    bytes_accessed = (4 * (load_p.size + weather_p.size + eps_p.size + Bp * out_w)
                      + 2 * w_slab.size + 4 * b_slab.size)
    cost = pl.CostEstimate(flops=flops, transcendentals=Bp * _LANES,
                           bytes_accessed=bytes_accessed)

    packed = pl.pallas_call(
        _make_kernel(load_dim, weather_dim),
        out_shape=jax.ShapeDtypeStruct((Bp, out_w), jnp.float32),
        grid=(nb,),
        in_specs=[
            pl.BlockSpec((tile_b, load_dim), lambda i: (i, 0)),
            pl.BlockSpec((tile_b, weather_dim), lambda i: (i, 0)),
            pl.BlockSpec((tile_b, _LANES), lambda i: (i, 0)),
            # Weight / bias slabs: constant block index -> DMA'd once, resident.
            pl.BlockSpec(w_slab.shape, lambda i: (0, 0)),
            pl.BlockSpec(b_slab.shape, lambda i: (0, 0)),
        ],
        out_specs=pl.BlockSpec((tile_b, out_w), lambda i: (i, 0)),
        compiler_params=pltpu.CompilerParams(
            dimension_semantics=("parallel",),      # shard batch tiles across TCs
            vmem_limit_bytes=32 * 1024 * 1024,      # explicit; fits v7x's 64 MiB
        ),
        cost_estimate=cost,
    )(load_p, weather_p, eps_p, w_slab, b_slab)

    mu = packed[:B, :latent_dim]
    logvar = packed[:B, _LANES:_LANES + latent_dim]
    recon_load = packed[:B, 2 * _LANES:2 * _LANES + load_dim]
    recon_weather = packed[:B, 3 * _LANES:3 * _LANES + weather_dim]
    return recon_load, recon_weather, mu, logvar


def make_params(key, load_dim, weather_dim, latent_dim, hidden_dims):
    """Deterministic synthetic parameters matching the PyTorch module shapes.

    Weights stored as (in, out); biases as (1, out). hidden_dims must have 2 entries."""
    h1, h2 = hidden_dims
    shapes = [
        (load_dim, h1), (1, h1), (h1, h2), (1, h2),          # load encoder
        (weather_dim, h1), (1, h1), (h1, h2), (1, h2),        # weather encoder
        (2 * h2, h2), (1, h2),                                 # fusion
        (h2, latent_dim), (1, latent_dim),                     # fc_mu
        (h2, latent_dim), (1, latent_dim),                     # fc_logvar
        (latent_dim, h2), (1, h2), (h2, h1), (1, h1),          # shared decoder
        (h1, load_dim), (1, load_dim),                         # load decoder
        (h1, weather_dim), (1, weather_dim),                   # weather decoder
    ]
    keys = jax.random.split(key, len(shapes))
    params = []
    for k, s in zip(keys, shapes):
        scale = 0.1 if s[0] != 1 else 0.01
        params.append(scale * jax.random.normal(k, s, dtype=jnp.float32))
    return params


def reference_forward(load, weather, eps, params):
    """Pure-JAX f32 reference mirroring the PyTorch forward (dropout = identity)."""
    (wle1, ble1, wle2, ble2,
     wwe1, bwe1, wwe2, bwe2,
     wf, bf, wmu, bmu, wlv, blv,
     wd1, bd1, wd2, bd2,
     wld, bld, wwd, bwd) = params

    relu = lambda x: jnp.maximum(x, 0.0)
    lf = relu(relu(load @ wle1 + ble1) @ wle2 + ble2)
    wfeat = relu(relu(weather @ wwe1 + bwe1) @ wwe2 + bwe2)
    h = relu(jnp.concatenate([lf, wfeat], axis=1) @ wf + bf)
    mu = h @ wmu + bmu
    logvar = h @ wlv + blv
    z = mu + eps * jnp.exp(0.5 * logvar)
    d = relu(relu(z @ wd1 + bd1) @ wd2 + bd2)
    return d @ wld + bld, d @ wwd + bwd, mu, logvar


if __name__ == "__main__":
    batch = 100
    load_dim = 16
    weather_dim = 8
    latent_dim = 4
    hidden_dims = (32, 16)

    key = jax.random.PRNGKey(0)
    k_load, k_weather, k_eps, k_params = jax.random.split(key, 4)

    load = jax.random.normal(k_load, (batch, load_dim), dtype=jnp.float32)
    weather = jax.random.normal(k_weather, (batch, weather_dim), dtype=jnp.float32)
    eps = jax.random.normal(k_eps, (batch, latent_dim), dtype=jnp.float32)

    params = make_params(k_params, load_dim, weather_dim, latent_dim, hidden_dims)

    # tile_b=32 -> grid=(4,) at this small batch, exercising the batch grid and
    # the batch-padding path (Bp=128 > B=100). Default tile is ~256 rows.
    outs = multimodal_vae_forward(load, weather, eps, params, tile_b=32)
    outs = jax.block_until_ready(outs)

    refs = reference_forward(load, weather, eps, params)
    # bf16 weight slab (f32 accumulation) vs. f32 reference -> relaxed tolerance.
    names = ("recon_load", "recon_weather", "mu", "logvar")
    for name, o, r in zip(names, outs, refs):
        assert o.shape == r.shape, (name, o.shape, r.shape)
        assert jnp.allclose(o, r, atol=1e-2, rtol=1e-2), name

    print("KERNEL_OK")
</pallas_src>

<mosaic_0001>
module attributes {stable_mosaic.version = 11 : i64} {
  func.func @kernel(%arg0: i32, %arg1: memref<32x16xf32, #tpu.memory_space<vmem>>, %arg2: memref<32x8xf32, #tpu.memory_space<vmem>>, %arg3: memref<32x128xf32, #tpu.memory_space<vmem>>, %arg4: memref<1536x128xbf16, #tpu.memory_space<vmem>>, %arg5: memref<16x128xf32, #tpu.memory_space<vmem>>, %arg6: memref<32x512xf32, #tpu.memory_space<vmem>>) attributes {dimension_semantics = [#tpu.dimension_semantics<parallel>], iteration_bounds = array<i64: 4>, scalar_prefetch = 0 : i64, scratch_operands = 0 : i64, tpu.core_type = #tpu.core_type<tc>, window_params = [{transform_indices = @transform_0, window_bounds = array<i64: 32, 16>}, {transform_indices = @transform_1, window_bounds = array<i64: 32, 8>}, {transform_indices = @transform_2, window_bounds = array<i64: 32, 128>}, {pipeline_mode = #tpu.pipeline_mode<synchronous>, transform_indices = @transform_3, window_bounds = array<i64: 1536, 128>}, {pipeline_mode = #tpu.pipeline_mode<synchronous>, transform_indices = @transform_4, window_bounds = array<i64: 16, 128>}, {transform_indices = @transform_5, window_bounds = array<i64: 32, 512>}]} {
    %c0 = arith.constant 0 : index
    %c0_0 = arith.constant 0 : index
    %0 = vector.load %arg1[%c0, %c0_0] : memref<32x16xf32, #tpu.memory_space<vmem>>, vector<32x16xf32>
    %c0_1 = arith.constant 0 : index
    %c0_2 = arith.constant 0 : index
    %1 = vector.load %arg4[%c0_1, %c0_2] : memref<1536x128xbf16, #tpu.memory_space<vmem>>, vector<16x128xbf16>
    %2 = arith.truncf %0 : vector<32x16xf32> to vector<32x16xbf16>
    %cst = arith.constant dense<0.000000e+00> : vector<32x128xf32>
    %3 = tpu.matmul %2, %1, %cst {dimension_numbers = #tpu.dot_dimension_numbers<[1], [0], [0], [1], [0, 0, 1, 1], [], []>} : vector<32x16xbf16>, vector<16x128xbf16>, vector<32x128xf32> -> vector<32x128xf32>
    %c0_3 = arith.constant 0 : index
    %c0_4 = arith.constant 0 : index
    %4 = vector.load %arg5[%c0_3, %c0_4] : memref<16x128xf32, #tpu.memory_space<vmem>>, vector<1x128xf32>
    %5 = vector.broadcast %4 : vector<1x128xf32> to vector<32x128xf32>
    %6 = arith.addf %3, %5 : vector<32x128xf32>
    %cst_5 = arith.constant 0.000000e+00 : f32
    %7 = vector.broadcast %cst_5 : f32 to vector<32x128xf32>
    %8 = arith.maximumf %6, %7 : vector<32x128xf32>
    %c0_6 = arith.constant 0 : index
    %c0_7 = arith.constant 0 : index
    %9 = vector.load %arg2[%c0_6, %c0_7] : memref<32x8xf32, #tpu.memory_space<vmem>>, vector<32x8xf32>
    %c128 = arith.constant 128 : index
    %c0_8 = arith.constant 0 : index
    %10 = vector.load %arg4[%c128, %c0_8] : memref<1536x128xbf16, #tpu.memory_space<vmem>>, vector<8x128xbf16>
    %11 = arith.truncf %9 : vector<32x8xf32> to vector<32x8xbf16>
    %cst_9 = arith.constant dense<0.000000e+00> : vector<32x128xf32>
    %12 = tpu.matmul %11, %10, %cst_9 {dimension_numbers = #tpu.dot_dimension_numbers<[1], [0], [0], [1], [0, 0, 1, 1], [], []>} : vector<32x8xbf16>, vector<8x128xbf16>, vector<32x128xf32> -> vector<32x128xf32>
    %c1 = arith.constant 1 : index
    %c0_10 = arith.constant 0 : index
    %13 = vector.load %arg5[%c1, %c0_10] : memref<16x128xf32, #tpu.memory_space<vmem>>, vector<1x128xf32>
    %14 = vector.broadcast %13 : vector<1x128xf32> to vector<32x128xf32>
    %15 = arith.addf %12, %14 : vector<32x128xf32>
    %cst_11 = arith.constant 0.000000e+00 : f32
    %16 = vector.broadcast %cst_11 : f32 to vector<32x128xf32>
    %17 = arith.maximumf %15, %16 : vector<32x128xf32>
    %c256 = arith.constant 256 : index
    %c0_12 = arith.constant 0 : index
    %18 = vector.load %arg4[%c256, %c0_12] : memref<1536x128xbf16, #tpu.memory_space<vmem>>, vector<128x128xbf16>
    %19 = arith.truncf %8 : vector<32x128xf32> to vector<32x128xbf16>
    %cst_13 = arith.constant dense<0.000000e+00> : vector<32x128xf32>
    %20 = tpu.matmul %19, %18, %cst_13 {dimension_numbers = #tpu.dot_dimension_numbers<[1], [0], [0], [1], [0, 0, 1, 1], [], []>} : vector<32x128xbf16>, vector<128x128xbf16>, vector<32x128xf32> -> vector<32x128xf32>
    %c2 = arith.constant 2 : index
    %c0_14 = arith.constant 0 : index
    %21 = vector.load %arg5[%c2, %c0_14] : memref<16x128xf32, #tpu.memory_space<vmem>>, vector<1x128xf32>
    %22 = vector.broadcast %21 : vector<1x128xf32> to vector<32x128xf32>
    %23 = arith.addf %20, %22 : vector<32x128xf32>
    %cst_15 = arith.constant 0.000000e+00 : f32
    %24 = vector.broadcast %cst_15 : f32 to vector<32x128xf32>
    %25 = arith.maximumf %23, %24 : vector<32x128xf32>
    %c384 = arith.constant 384 : index
    %c0_16 = arith.constant 0 : index
    %26 = vector.load %arg4[%c384, %c0_16] : memref<1536x128xbf16, #tpu.memory_space<vmem>>, vector<128x128xbf16>
    %27 = arith.truncf %17 : vector<32x128xf32> to vector<32x128xbf16>
    %cst_17 = arith.constant dense<0.000000e+00> : vector<32x128xf32>
    %28 = tpu.matmul %27, %26, %cst_17 {dimension_numbers = #tpu.dot_dimension_numbers<[1], [0], [0], [1], [0, 0, 1, 1], [], []>} : vector<32x128xbf16>, vector<128x128xbf16>, vector<32x128xf32> -> vector<32x128xf32>
    %c3 = arith.constant 3 : index
    %c0_18 = arith.constant 0 : index
    %29 = vector.load %arg5[%c3, %c0_18] : memref<16x128xf32, #tpu.memory_space<vmem>>, vector<1x128xf32>
    %30 = vector.broadcast %29 : vector<1x128xf32> to vector<32x128xf32>
    %31 = arith.addf %28, %30 : vector<32x128xf32>
    %cst_19 = arith.constant 0.000000e+00 : f32
    %32 = vector.broadcast %cst_19 : f32 to vector<32x128xf32>
    %33 = arith.maximumf %31, %32 : vector<32x128xf32>
    %c512 = arith.constant 512 : index
    %c0_20 = arith.constant 0 : index
    %34 = vector.load %arg4[%c512, %c0_20] : memref<1536x128xbf16, #tpu.memory_space<vmem>>, vector<128x128xbf16>
    %35 = arith.truncf %25 : vector<32x128xf32> to vector<32x128xbf16>
    %cst_21 = arith.constant dense<0.000000e+00> : vector<32x128xf32>
    %36 = tpu.matmul %35, %34, %cst_21 {dimension_numbers = #tpu.dot_dimension_numbers<[1], [0], [0], [1], [0, 0, 1, 1], [], []>} : vector<32x128xbf16>, vector<128x128xbf16>, vector<32x128xf32> -> vector<32x128xf32>
    %c4 = arith.constant 4 : index
    %c0_22 = arith.constant 0 : index
    %37 = vector.load %arg5[%c4, %c0_22] : memref<16x128xf32, #tpu.memory_space<vmem>>, vector<1x128xf32>
    %38 = vector.broadcast %37 : vector<1x128xf32> to vector<32x128xf32>
    %39 = arith.addf %36, %38 : vector<32x128xf32>
    %c640 = arith.constant 640 : index
    %c0_23 = arith.constant 0 : index
    %40 = vector.load %arg4[%c640, %c0_23] : memref<1536x128xbf16, #tpu.memory_space<vmem>>, vector<128x128xbf16>
    %41 = arith.truncf %33 : vector<32x128xf32> to vector<32x128xbf16>
    %cst_24 = arith.constant dense<0.000000e+00> : vector<32x128xf32>
    %42 = tpu.matmul %41, %40, %cst_24 {dimension_numbers = #tpu.dot_dimension_numbers<[1], [0], [0], [1], [0, 0, 1, 1], [], []>} : vector<32x128xbf16>, vector<128x128xbf16>, vector<32x128xf32> -> vector<32x128xf32>
    %43 = arith.addf %42, %39 : vector<32x128xf32>
    %c5 = arith.constant 5 : index
    %c0_25 = arith.constant 0 : index
    %44 = vector.load %arg5[%c5, %c0_25] : memref<16x128xf32, #tpu.memory_space<vmem>>, vector<1x128xf32>
    %45 = vector.broadcast %44 : vector<1x128xf32> to vector<32x128xf32>
    %46 = arith.addf %43, %45 : vector<32x128xf32>
    %cst_26 = arith.constant 0.000000e+00 : f32
    %47 = vector.broadcast %cst_26 : f32 to vector<32x128xf32>
    %48 = arith.maximumf %46, %47 : vector<32x128xf32>
    %c768 = arith.constant 768 : index
    %c0_27 = arith.constant 0 : index
    %49 = vector.load %arg4[%c768, %c0_27] : memref<1536x128xbf16, #tpu.memory_space<vmem>>, vector<128x128xbf16>
    %50 = arith.truncf %48 : vector<32x128xf32> to vector<32x128xbf16>
    %cst_28 = arith.constant dense<0.000000e+00> : vector<32x128xf32>
    %51 = tpu.matmul %50, %49, %cst_28 {dimension_numbers = #tpu.dot_dimension_numbers<[1], [0], [0], [1], [0, 0, 1, 1], [], []>} : vector<32x128xbf16>, vector<128x128xbf16>, vector<32x128xf32> -> vector<32x128xf32>
    %c6 = arith.constant 6 : index
    %c0_29 = arith.constant 0 : index
    %52 = vector.load %arg5[%c6, %c0_29] : memref<16x128xf32, #tpu.memory_space<vmem>>, vector<1x128xf32>
    %53 = vector.broadcast %52 : vector<1x128xf32> to vector<32x128xf32>
    %54 = arith.addf %51, %53 : vector<32x128xf32>
    %c896 = arith.constant 896 : index
    %c0_30 = arith.constant 0 : index
    %55 = vector.load %arg4[%c896, %c0_30] : memref<1536x128xbf16, #tpu.memory_space<vmem>>, vector<128x128xbf16>
    %56 = arith.truncf %48 : vector<32x128xf32> to vector<32x128xbf16>
    %cst_31 = arith.constant dense<0.000000e+00> : vector<32x128xf32>
    %57 = tpu.matmul %56, %55, %cst_31 {dimension_numbers = #tpu.dot_dimension_numbers<[1], [0], [0], [1], [0, 0, 1, 1], [], []>} : vector<32x128xbf16>, vector<128x128xbf16>, vector<32x128xf32> -> vector<32x128xf32>
    %c7 = arith.constant 7 : index
    %c0_32 = arith.constant 0 : index
    %58 = vector.load %arg5[%c7, %c0_32] : memref<16x128xf32, #tpu.memory_space<vmem>>, vector<1x128xf32>
    %59 = vector.broadcast %58 : vector<1x128xf32> to vector<32x128xf32>
    %60 = arith.addf %57, %59 : vector<32x128xf32>
    %c0_33 = arith.constant 0 : index
    %c0_34 = arith.constant 0 : index
    %61 = vector.load %arg3[%c0_33, %c0_34] : memref<32x128xf32, #tpu.memory_space<vmem>>, vector<32x128xf32>
    %cst_35 = arith.constant 5.000000e-01 : f32
    %62 = vector.broadcast %cst_35 : f32 to vector<32x128xf32>
    %63 = arith.mulf %62, %60 : vector<32x128xf32>
    %64 = math.exp %63 : vector<32x128xf32>
    %65 = arith.mulf %61, %64 : vector<32x128xf32>
    %66 = arith.addf %54, %65 : vector<32x128xf32>
    %c1024 = arith.constant 1024 : index
    %c0_36 = arith.constant 0 : index
    %67 = vector.load %arg4[%c1024, %c0_36] : memref<1536x128xbf16, #tpu.memory_space<vmem>>, vector<128x128xbf16>
    %68 = arith.truncf %66 : vector<32x128xf32> to vector<32x128xbf16>
    %cst_37 = arith.constant dense<0.000000e+00> : vector<32x128xf32>
    %69 = tpu.matmul %68, %67, %cst_37 {dimension_numbers = #tpu.dot_dimension_numbers<[1], [0], [0], [1], [0, 0, 1, 1], [], []>} : vector<32x128xbf16>, vector<128x128xbf16>, vector<32x128xf32> -> vector<32x128xf32>
    %c8 = arith.constant 8 : index
    %c0_38 = arith.constant 0 : index
    %70 = vector.load %arg5[%c8, %c0_38] : memref<16x128xf32, #tpu.memory_space<vmem>>, vector<1x128xf32>
    %71 = vector.broadcast %70 : vector<1x128xf32> to vector<32x128xf32>
    %72 = arith.addf %69, %71 : vector<32x128xf32>
    %cst_39 = arith.constant 0.000000e+00 : f32
    %73 = vector.broadcast %cst_39 : f32 to vector<32x128xf32>
    %74 = arith.maximumf %72, %73 : vector<32x128xf32>
    %c1152 = arith.constant 1152 : index
    %c0_40 = arith.constant 0 : index
    %75 = vector.load %arg4[%c1152, %c0_40] : memref<1536x128xbf16, #tpu.memory_space<vmem>>, vector<128x128xbf16>
    %76 = arith.truncf %74 : vector<32x128xf32> to vector<32x128xbf16>
    %cst_41 = arith.constant dense<0.000000e+00> : vector<32x128xf32>
    %77 = tpu.matmul %76, %75, %cst_41 {dimension_numbers = #tpu.dot_dimension_numbers<[1], [0], [0], [1], [0, 0, 1, 1], [], []>} : vector<32x128xbf16>, vector<128x128xbf16>, vector<32x128xf32> -> vector<32x128xf32>
    %c9 = arith.constant 9 : index
    %c0_42 = arith.constant 0 : index
    %78 = vector.load %arg5[%c9, %c0_42] : memref<16x128xf32, #tpu.memory_space<vmem>>, vector<1x128xf32>
    %79 = vector.broadcast %78 : vector<1x128xf32> to vector<32x128xf32>
    %80 = arith.addf %77, %79 : vector<32x128xf32>
    %cst_43 = arith.constant 0.000000e+00 : f32
    %81 = vector.broadcast %cst_43 : f32 to vector<32x128xf32>
    %82 = arith.maximumf %80, %81 : vector<32x128xf32>
    %c1280 = arith.constant 1280 : index
    %c0_44 = arith.constant 0 : index
    %83 = vector.load %arg4[%c1280, %c0_44] : memref<1536x128xbf16, #tpu.memory_space<vmem>>, vector<128x128xbf16>
    %84 = arith.truncf %82 : vector<32x128xf32> to vector<32x128xbf16>
    %cst_45 = arith.constant dense<0.000000e+00> : vector<32x128xf32>
    %85 = tpu.matmul %84, %83, %cst_45 {dimension_numbers = #tpu.dot_dimension_numbers<[1], [0], [0], [1], [0, 0, 1, 1], [], []>} : vector<32x128xbf16>, vector<128x128xbf16>, vector<32x128xf32> -> vector<32x128xf32>
    %c10 = arith.constant 10 : index
    %c0_46 = arith.constant 0 : index
    %86 = vector.load %arg5[%c10, %c0_46] : memref<16x128xf32, #tpu.memory_space<vmem>>, vector<1x128xf32>
    %87 = vector.broadcast %86 : vector<1x128xf32> to vector<32x128xf32>
    %88 = arith.addf %85, %87 : vector<32x128xf32>
    %c1408 = arith.constant 1408 : index
    %c0_47 = arith.constant 0 : index
    %89 = vector.load %arg4[%c1408, %c0_47] : memref<1536x128xbf16, #tpu.memory_space<vmem>>, vector<128x128xbf16>
    %90 = arith.truncf %82 : vector<32x128xf32> to vector<32x128xbf16>
    %cst_48 = arith.constant dense<0.000000e+00> : vector<32x128xf32>
    %91 = tpu.matmul %90, %89, %cst_48 {dimension_numbers = #tpu.dot_dimension_numbers<[1], [0], [0], [1], [0, 0, 1, 1], [], []>} : vector<32x128xbf16>, vector<128x128xbf16>, vector<32x128xf32> -> vector<32x128xf32>
    %c11 = arith.constant 11 : index
    %c0_49 = arith.constant 0 : index
    %92 = vector.load %arg5[%c11, %c0_49] : memref<16x128xf32, #tpu.memory_space<vmem>>, vector<1x128xf32>
    %93 = vector.broadcast %92 : vector<1x128xf32> to vector<32x128xf32>
    %94 = arith.addf %91, %93 : vector<32x128xf32>
    %c0_50 = arith.constant 0 : index
    %c0_51 = arith.constant 0 : index
    %95 = vector.load %arg6[%c0_50, %c0_51] : memref<32x512xf32, #tpu.memory_space<vmem>>, vector<32x128xf32>
    tpu.vector_store %arg6[%c0_50, %c0_51], %54 {strides = array<i32>} : memref<32x512xf32, #tpu.memory_space<vmem>>, vector<32x128xf32>,
    %c0_52 = arith.constant 0 : index
    %c128_53 = arith.constant 128 : index
    %96 = vector.load %arg6[%c0_52, %c128_53] : memref<32x512xf32, #tpu.memory_space<vmem>>, vector<32x128xf32>
    tpu.vector_store %arg6[%c0_52, %c128_53], %60 {strides = array<i32>} : memref<32x512xf32, #tpu.memory_space<vmem>>, vector<32x128xf32>,
    %c0_54 = arith.constant 0 : index
    %c256_55 = arith.constant 256 : index
    %97 = vector.load %arg6[%c0_54, %c256_55] : memref<32x512xf32, #tpu.memory_space<vmem>>, vector<32x128xf32>
    tpu.vector_store %arg6[%c0_54, %c256_55], %88 {strides = array<i32>} : memref<32x512xf32, #tpu.memory_space<vmem>>, vector<32x128xf32>,
    %c0_56 = arith.constant 0 : index
    %c384_57 = arith.constant 384 : index
    %98 = vector.load %arg6[%c0_56, %c384_57] : memref<32x512xf32, #tpu.memory_space<vmem>>, vector<32x128xf32>
    tpu.vector_store %arg6[%c0_56, %c384_57], %94 {strides = array<i32>} : memref<32x512xf32, #tpu.memory_space<vmem>>, vector<32x128xf32>,
    return
  }
  func.func @transform_0(%arg0: i32) -> (i32, i32) {
    %c0_i32 = arith.constant 0 : i32
    %c0_i32_0 = arith.constant 0 : i32
    return %arg0, %c0_i32 : i32, i32
  }
  func.func @transform_1(%arg0: i32) -> (i32, i32) {
    %c0_i32 = arith.constant 0 : i32
    %c0_i32_0 = arith.constant 0 : i32
    return %arg0, %c0_i32 : i32, i32
  }
  func.func @transform_2(%arg0: i32) -> (i32, i32) {
    %c0_i32 = arith.constant 0 : i32
    %c0_i32_0 = arith.constant 0 : i32
    return %arg0, %c0_i32 : i32, i32
  }
  func.func @transform_3(%arg0: i32) -> (i32, i32) {
    %c0_i32 = arith.constant 0 : i32
    %c0_i32_0 = arith.constant 0 : i32
    %c0_i32_1 = arith.constant 0 : i32
    return %c0_i32, %c0_i32_0 : i32, i32
  }
  func.func @transform_4(%arg0: i32) -> (i32, i32) {
    %c0_i32 = arith.constant 0 : i32
    %c0_i32_0 = arith.constant 0 : i32
    %c0_i32_1 = arith.constant 0 : i32
    return %c0_i32, %c0_i32_0 : i32, i32
  }
  func.func @transform_5(%arg0: i32) -> (i32, i32) {
    %c0_i32 = arith.constant 0 : i32
    %c0_i32_0 = arith.constant 0 : i32
    return %arg0, %c0_i32 : i32, i32
  }
}

</mosaic_0001>

<llo_original>
// kernel: tpu_custom_call.1
$region0: #{tpu_custom_call.1}
  #allocation0 [shape = 'u32[]', space=smem, size = 0x4, offset = 0x4, fixed_abs, tag = 'smem constant byte address 0x4 - core index']
  #allocation1 [shape = 'u32[144,128]{1,0:T(1,128)}', space=vmem, size = 0x12000, scoped, tag = 'internal scratch']
  %s0 = inlined_call_operand.vmem [shape: f32[128,16], index: 0, kind: input, shape index: {}]
  %s1 = inlined_call_operand.vmem [shape: f32[128,8], index: 1, kind: input, shape index: {}]
  %s2 = inlined_call_operand.vmem [shape: f32[128,128], index: 2, kind: input, shape index: {}]
  %s3 = inlined_call_operand.hbm [shape: bf16[1536,128], index: 3, kind: input, shape index: {}]
  %s4 = inlined_call_operand.vmem [shape: f32[16,128], index: 4, kind: input, shape index: {}]
  %s5 = inlined_call_operand.hbm [shape: f32[128,512], index: 5, kind: output, shape index: {}]
  %s6 = sld [smem:[#allocation0]]
  $region57: #{tpu_custom_call.1} parent=0
    _
  %s8 = ssub.s32 1, %s6
  %s9 = scalar_select 0, %s8, %s6
  $region1: #{tpu_custom_call.1} parent=0
    #allocation2 [shape = 'u8[393216]{0}', space=vmem, size = 0x60000, scoped, tag = 'input window, operand 3, single buffered']
    #allocation3 [shape = 's32[2]{0}', space=sflag, size = 0x8, scoped, tag = 'scoped memory for tpu_custom_call.1']
    #allocation4 [shape = 's32[2]{0}', space=sflag, size = 0x8, scoped, tag = 'scoped memory for tpu_custom_call.1']
    #allocation5 [shape = 'u8[131072]{0}', space=vmem, size = 0x20000, scoped, tag = 'output window, operand 0']
    %10 = vsyncpa [#allocation3], 0
    %11 = vsyncpa [#allocation4], 0
    %s12 = scalar_lea.sflag [#allocation4], 1
    %13 = vsyncpa %s12, 0
    loop: start=0, step=1, limit=6
    $region2: #{tpu_custom_call.1} parent=1 // loop_pre_header
      _
    $region3: #{tpu_custom_call.1} parent=1 // loop_header
      %s15 = sphi 0, %s19
      %p16 = scmp.ge.s32.totalorder %s15, 6
      %s25 = sphi 0, %s27
      %s28 = sphi 0, %s25
      %s29 = sphi 0, %s28
      %s45 = sphi 0, %s29
      %s51 = sphi 0, %s53
      %s54 = sphi 0, %s51
      %s55 = sphi 0, %s54
      %s71 = sphi 0, %s55
      %s77 = sphi 0, %s79
      %s80 = sphi 0, %s77
      %s81 = sphi 0, %s80
      %s97 = sphi 0, %s81
      %s101 = sphi 0, %s101
      %s103 = sphi 0, %s101
      %s104 = sphi 0, %s103
      %s118 = sphi 0, %s104
      %s122 = sphi 0, %s122
      %s124 = sphi 0, %s122
      %s125 = sphi 0, %s124
      %s139 = sphi 0, %s125
      %s145 = sphi 0, %s147
      %s148 = sphi 0, %s145
      %s149 = sphi 0, %s148
      %s165 = sphi 0, %s149
    $region4: #{tpu_custom_call.1} parent=1 // loop_header_branch
      %18 = sbr.rel (%p16) target = $region8
    $region5: #{tpu_custom_call.1} parent=1 // loop_body
      %s20 = ssub.s32 %s15, 1
      %s21 = ssub.s32 %s15, 2
      %s22 = sadd.s32 %s15, 1
      %s23 = ssub.s32 %s15, %s22
      %p24 = scmp.eq.s32.totalorder %s23, 0
      %s26 = sadd.s32 %s25, 1
      %s27 = scalar_select %p24, %s25, %s26
      %p30 = pneg %p24
      %p31 = scmp.eq.s32.totalorder %s15, 3
      %p32 = por %p30, %p31
      %p33 = scmp.ne.s32.totalorder %s25, %s28
      %p34 = scmp.eq.s32.totalorder %s15, 0
      %p35 = por %p33, %p34
      %p36 = scmp.ne.s32.totalorder %s25, %s28
      %p37 = scmp.eq.s32.totalorder %s20, 3
      %p38 = por %p36, %p37
      %p39 = scmp.ne.s32.totalorder %s28, %s29
      %p40 = scmp.eq.s32.totalorder %s20, 0
      %p41 = por %p39, %p40
      %p42 = scmp.ne.s32.totalorder %s28, %s29
      %p43 = scmp.eq.s32.totalorder %s21, 3
      %p44 = por %p42, %p43
      %p46 = scmp.ne.s32.totalorder %s29, %s45
      %p47 = scmp.eq.s32.totalorder %s21, 0
      %p48 = por %p46, %p47
      %s49 = ssub.s32 %s15, %s22
      %p50 = scmp.eq.s32.totalorder %s49, 0
      %s52 = sadd.s32 %s51, 1
      %s53 = scalar_select %p50, %s51, %s52
      %p56 = pneg %p50
      %p57 = scmp.eq.s32.totalorder %s15, 3
      %p58 = por %p56, %p57
      %p59 = scmp.ne.s32.totalorder %s51, %s54
      %p60 = scmp.eq.s32.totalorder %s15, 0
      %p61 = por %p59, %p60
      %p62 = scmp.ne.s32.totalorder %s51, %s54
      %p63 = scmp.eq.s32.totalorder %s20, 3
      %p64 = por %p62, %p63
      %p65 = scmp.ne.s32.totalorder %s54, %s55
      %p66 = scmp.eq.s32.totalorder %s20, 0
      %p67 = por %p65, %p66
      %p68 = scmp.ne.s32.totalorder %s54, %s55
      %p69 = scmp.eq.s32.totalorder %s21, 3
      %p70 = por %p68, %p69
      %p72 = scmp.ne.s32.totalorder %s55, %s71
      %p73 = scmp.eq.s32.totalorder %s21, 0
      %p74 = por %p72, %p73
      %s75 = ssub.s32 %s15, %s22
      %p76 = scmp.eq.s32.totalorder %s75, 0
      %s78 = sadd.s32 %s77, 1
      %s79 = scalar_select %p76, %s77, %s78
      %p82 = pneg %p76
      %p83 = scmp.eq.s32.totalorder %s15, 3
      %p84 = por %p82, %p83
      %p85 = scmp.ne.s32.totalorder %s77, %s80
      %p86 = scmp.eq.s32.totalorder %s15, 0
      %p87 = por %p85, %p86
      %p88 = scmp.ne.s32.totalorder %s77, %s80
      %p89 = scmp.eq.s32.totalorder %s20, 3
      %p90 = por %p88, %p89
      %p91 = scmp.ne.s32.totalorder %s80, %s81
      %p92 = scmp.eq.s32.totalorder %s20, 0
      %p93 = por %p91, %p92
      %p94 = scmp.ne.s32.totalorder %s80, %s81
      %p95 = scmp.eq.s32.totalorder %s21, 3
      %p96 = por %p94, %p95
      %p98 = scmp.ne.s32.totalorder %s81, %s97
      %p99 = scmp.eq.s32.totalorder %s21, 0
      %p100 = por %p98, %p99
      %s102 = sadd.s32 %s101, 1
      %p105 = scmp.eq.s32.totalorder %s15, 3
      %p106 = scmp.ne.s32.totalorder %s101, %s103
      %p107 = scmp.eq.s32.totalorder %s15, 0
      %p108 = por %p106, %p107
      %p109 = scmp.ne.s32.totalorder %s101, %s103
      %p110 = scmp.eq.s32.totalorder %s20, 3
      %p111 = por %p109, %p110
      %p112 = scmp.ne.s32.totalorder %s103, %s104
      %p113 = scmp.eq.s32.totalorder %s20, 0
      %p114 = por %p112, %p113
      %p115 = scmp.ne.s32.totalorder %s103, %s104
      %p116 = scmp.eq.s32.totalorder %s21, 3
      %p117 = por %p115, %p116
      %p119 = scmp.ne.s32.totalorder %s104, %s118
      %p120 = scmp.eq.s32.totalorder %s21, 0
      %p121 = por %p119, %p120
      %s123 = sadd.s32 %s122, 1
      %p126 = scmp.eq.s32.totalorder %s15, 3
      %p127 = scmp.ne.s32.totalorder %s122, %s124
      %p128 = scmp.eq.s32.totalorder %s15, 0
      %p129 = por %p127, %p128
      %p130 = scmp.ne.s32.totalorder %s122, %s124
      %p131 = scmp.eq.s32.totalorder %s20, 3
      %p132 = por %p130, %p131
      %p133 = scmp.ne.s32.totalorder %s124, %s125
      %p134 = scmp.eq.s32.totalorder %s20, 0
      %p135 = por %p133, %p134
      %p136 = scmp.ne.s32.totalorder %s124, %s125
      %p137 = scmp.eq.s32.totalorder %s21, 3
      %p138 = por %p136, %p137
      %p140 = scmp.ne.s32.totalorder %s125, %s139
      %p141 = scmp.eq.s32.totalorder %s21, 0
      %p142 = por %p140, %p141
      %s143 = ssub.s32 %s15, %s22
      %p144 = scmp.eq.s32.totalorder %s143, 0
      %s146 = sadd.s32 %s145, 1
      %s147 = scalar_select %p144, %s145, %s146
      %p150 = pneg %p144
      %p151 = scmp.eq.s32.totalorder %s15, 3
      %p152 = por %p150, %p151
      %p153 = scmp.ne.s32.totalorder %s145, %s148
      %p154 = scmp.eq.s32.totalorder %s15, 0
      %p155 = por %p153, %p154
      %p156 = scmp.ne.s32.totalorder %s145, %s148
      %p157 = scmp.eq.s32.totalorder %s20, 3
      %p158 = por %p156, %p157
      %p159 = scmp.ne.s32.totalorder %s148, %s149
      %p160 = scmp.eq.s32.totalorder %s20, 0
      %p161 = por %p159, %p160
      %p162 = scmp.ne.s32.totalorder %s148, %s149
      %p163 = scmp.eq.s32.totalorder %s21, 3
      %p164 = por %p162, %p163
      %p166 = scmp.ne.s32.totalorder %s149, %s165
      %p167 = scmp.eq.s32.totalorder %s21, 0
      %p168 = por %p166, %p167
      %p169 = scmp.le.s32.totalorder 1, %s15
      %p170 = scmp.lt.s32.totalorder %s15, 5
      %p171 = pnand %p169, %p170
      %p172 = pneg %p171
      // Predicated region
      $region9: #{tpu_custom_call.1} parent=5 // pred_check
        _
      $region10: #{tpu_custom_call.1} parent=5 // pred_check_branch
        %174 = sbr.rel (%p171) target = $region12
      $region11: #{tpu_custom_call.1} parent=5 // pred_region
        %s175 = ssub.s32 %s15, 1
        // Predicated region
        $region13: #{tpu_custom_call.1} parent=11 // pred_check
          %p176 = pneg %p114
        $region14: #{tpu_custom_call.1} parent=11 // pred_check_branch
          %178 = sbr.rel (%p176) target = $region16
        $region15: #{tpu_custom_call.1} parent=11 // pred_region
          %s180 = ssub.s32 12288, 12288
          %181 = vsyncadd [#allocation3], %s180
          %s182 = sshll.u32 [#allocation2], 4
          %s183 = int_to_ptr.vmem [resolvable:$true] %s182
          %188 = dma.hbm_to_vmem [thread:$0]  %s3, 12288, %s183, [#allocation3], 64, 64, 4
        $region16: #{tpu_custom_call.1} parent=11 // pred_fallthru
          _
        // Predicated region
        $region17: #{tpu_custom_call.1} parent=11 // pred_check
          %p189 = pneg %p135
        $region18: #{tpu_custom_call.1} parent=11 // pred_check_branch
          %191 = sbr.rel (%p189) target = $region20
        $region19: #{tpu_custom_call.1} parent=11 // pred_region
          _
        $region20: #{tpu_custom_call.1} parent=11 // pred_fallthru
          _
      $region12: #{tpu_custom_call.1} parent=5 // pred_fallthru
        _
      %p192 = scmp.lt.s32.totalorder %s15, 4
      // Predicated region
      $region21: #{tpu_custom_call.1} parent=5 // pred_check
        %p193 = pneg %p192
      $region22: #{tpu_custom_call.1} parent=5 // pred_check_branch
        %195 = sbr.rel (%p193) target = $region24
      $region23: #{tpu_custom_call.1} parent=5 // pred_region
        // Predicated region
        $region25: #{tpu_custom_call.1} parent=23 // pred_check
          %p196 = pneg %p35
        $region26: #{tpu_custom_call.1} parent=23 // pred_check_branch
          %198 = sbr.rel (%p196) target = $region28
        $region27: #{tpu_custom_call.1} parent=23 // pred_region
          %s199 = smul.u32 4, %s15
          %p200 = scmp.lt.s32.totalorder %s199, 15
          %s201 = scalar_select %p200, %s199, 15
          %s202 = smul.addr %s201, 8
          %s203 = scalar_lea.vmem %s0, %s202
          %s204 = smul.u32 4, %s15
        $region28: #{tpu_custom_call.1} parent=23 // pred_fallthru
          _
        // Predicated region
        $region29: #{tpu_custom_call.1} parent=23 // pred_check
          %p205 = pneg %p61
        $region30: #{tpu_custom_call.1} parent=23 // pred_check_branch
          %207 = sbr.rel (%p205) target = $region32
        $region31: #{tpu_custom_call.1} parent=23 // pred_region
          %s208 = smul.u32 4, %s15
          %p209 = scmp.lt.s32.totalorder %s208, 15
          %s210 = scalar_select %p209, %s208, 15
          %s211 = smul.addr %s210, 8
          %s212 = scalar_lea.vmem %s1, %s211
          %s213 = smul.u32 4, %s15
        $region32: #{tpu_custom_call.1} parent=23 // pred_fallthru
          _
        // Predicated region
        $region33: #{tpu_custom_call.1} parent=23 // pred_check
          %p214 = pneg %p87
        $region34: #{tpu_custom_call.1} parent=23 // pred_check_branch
          %216 = sbr.rel (%p214) target = $region36
        $region35: #{tpu_custom_call.1} parent=23 // pred_region
          %s217 = smul.u32 4, %s15
          %p218 = scmp.lt.s32.totalorder %s217, 15
          %s219 = scalar_select %p218, %s217, 15
          %s220 = smul.addr %s219, 8
          %s221 = scalar_lea.vmem %s2, %s220
          %s222 = smul.u32 4, %s15
        $region36: #{tpu_custom_call.1} parent=23 // pred_fallthru
          _
      $region24: #{tpu_custom_call.1} parent=5 // pred_fallthru
        _
      %p223 = scmp.le.s32.totalorder 1, %s15
      %p224 = scmp.lt.s32.totalorder %s15, 5
      %p225 = pnand %p223, %p224
      %p226 = pneg %p225
      // Predicated region
      $region37: #{tpu_custom_call.1} parent=5 // pred_check
        _
      $region38: #{tpu_custom_call.1} parent=5 // pred_check_branch
        %228 = sbr.rel (%p225) target = $region40
      $region39: #{tpu_custom_call.1} parent=5 // pred_region
        %s229 = ssub.s32 %s15, 1
        // Predicated region
        $region41: #{tpu_custom_call.1} parent=39 // pred_check
          %p230 = pneg %p114
        $region42: #{tpu_custom_call.1} parent=39 // pred_check_branch
          %232 = sbr.rel (%p230) target = $region44
        $region43: #{tpu_custom_call.1} parent=39 // pred_region
          %233 = dma.done [#allocation3], 12288
        $region44: #{tpu_custom_call.1} parent=39 // pred_fallthru
          _
        %s234 = smul.u32 4, %s20
        %p235 = scmp.lt.s32.totalorder %s234, 15
        %s236 = scalar_select %p235, %s234, 15
        %s237 = smul.addr %s236, 8
        %s238 = scalar_lea.vmem %s0, %s237
        %p239 = pneg %p41
        %p240 = pneg %p38
        %s241 = smul.u32 4, %s20
        %p242 = scmp.lt.s32.totalorder %s241, 15
        %s243 = scalar_select %p242, %s241, 15
        %s244 = smul.addr %s243, 8
        %s245 = scalar_lea.vmem %s1, %s244
        %p246 = pneg %p67
        %p247 = pneg %p64
        %s248 = smul.u32 4, %s20
        %p249 = scmp.lt.s32.totalorder %s248, 15
        %s250 = scalar_select %p249, %s248, 15
        %s251 = smul.addr %s250, 8
        %s252 = scalar_lea.vmem %s2, %s251
        %p253 = pneg %p93
        %p254 = pneg %p90
        %p255 = pneg %p114
        %p256 = pneg %p111
        %p257 = pneg %p135
        %p258 = pneg %p132
        %p259 = pneg %p161
        %p260 = pneg %p158
        %s261 = sand.u32 %s148, 1
        %s262 = scalar_lea.sflag [#allocation4], %s261
        %s263 = sand.u32 %s148, 1
        %s264 = smul.addr %s263, 128
        %s265 = scalar_lea.vmem [#allocation5], %s264
        %s266 = smul.u32 4, %s20
        %p267 = scmp.lt.s32.totalorder %s266, 15
        %s268 = scalar_select %p267, %s266, 15
        %s269 = smul.addr %s268, 8
        %s270 = scalar_lea.vmem %s0, %s269
        %s271 = smul.u32 4, %s20
        %s272 = smul.u32 4, %s20
        %p273 = scmp.lt.s32.totalorder %s272, 15
        %s274 = scalar_select %p273, %s272, 15
        %s275 = smul.addr %s274, 8
        %s276 = scalar_lea.vmem %s1, %s275
        %s277 = smul.u32 4, %s20
        %s278 = smul.u32 4, %s20
        %p279 = scmp.lt.s32.totalorder %s278, 15
        %s280 = scalar_select %p279, %s278, 15
        %s281 = smul.addr %s280, 8
        %s282 = scalar_lea.vmem %s2, %s281
        %s283 = smul.u32 4, %s20
        %s284 = smul.u32 4, %s20
        %v286 = vld [vmem:[%s270] sm:$0xff]
        %v287 = vld [vmem:[%s270 + $0x8] sm:$0xff]
        %v288 = vld [vmem:[%s270 + $0x10] sm:$0xff]
        %v289 = vld [vmem:[%s270 + $0x18] sm:$0xff]
        %v290 = vld [vmem:[#allocation2] sm:$0xf]
        %v291 = vld [vmem:[#allocation2 + $0x4] sm:$0xf]
        %v292 = vpack.c.bf16 %v287, %v286
        %v293 = vpack.c.bf16 %v289, %v288
        %v294 = vld [vmem:[%s4] sm:$0x1]
        %v295 = vlaneseq
        %v296 = vshrl.u32 %v295, 7
        %v297 = vsub.s32 0, %v296
        %v298 = vrot.slane %v294, %v297
        %v301 = vunpack.c.l.b16 %v290
        %v302 = vunpack.c.l.b16 %v291
        %v303 = vpack.c.b16 %v302, %v301
        %vm305 = vcmask 130048
        %v307 = vsel %vm305, %v292, 0
        %v310 = vsel %vm305, %v293, 0
        %312 = vmatprep.subr.bf16.mxu0 0
        %313 = vmatpush1.bf16.msra.mxu0 %v303
        %314 = vmatprep.subr.bf16.mxu0 0
        %315 = vmatpush1.bf16.msra.mxu0 0
        %316 = vmatprep.subr.bf16.mxu0 0
        %317 = vmatpush1.bf16.msra.mxu0 0
        %318 = vmatprep.subr.bf16.mxu0 0
        %319 = vmatpush1.bf16.msra.mxu0 0
        %320 = vmatprep.subr.bf16.mxu0 0
        %321 = vmatpush1.bf16.msra.mxu0 0
        %322 = vmatprep.subr.bf16.mxu0 0
        %323 = vmatpush1.bf16.msra.mxu0 0
        %324 = vmatprep.subr.bf16.mxu0 0
        %325 = vmatpush1.bf16.msra.mxu0 0
        %326 = vmatprep.subr.bf16.mxu0 0
        %327 = vmatpush1.bf16.msra.mxu0 0
        %328 = vmatprep.subr.bf16.mxu0 0
        %329 = vmatpush1.bf16.msra.mxu0 0
        %330 = vmatprep.subr.bf16.mxu0 0
        %331 = vmatpush1.bf16.msra.mxu0 0
        %332 = vmatprep.subr.bf16.mxu0 0
        %333 = vmatpush1.bf16.msra.mxu0 0
        %334 = vmatprep.subr.bf16.mxu0 0
        %335 = vmatpush1.bf16.msra.mxu0 0
        %336 = vmatprep.subr.bf16.mxu0 0
        %337 = vmatpush1.bf16.msra.mxu0 0
        %338 = vmatprep.subr.bf16.mxu0 0
        %339 = vmatpush1.bf16.msra.mxu0 0
        %340 = vmatprep.subr.bf16.mxu0 0
        %341 = vmatpush1.bf16.msra.mxu0 0
        %342 = vmatprep.subr.bf16.mxu0 0
        %343 = vmatpush1.bf16.msra.mxu0 0
        %344 = vmatprep.mubr.bf16.mxu0 0
        %345 = vmatmul.mubr.bf16.gmra.mrb[0].mxu0 %v307
        %v346 = vpop.f32.mrb[0].mxu0
        %v347 = vadd.f32 %v298, %v346
        %v348 = vpop.f32.mrb[0].mxu0
        %v349 = vpop.f32.mrb[0].mxu0
        %v350 = vadd.f32 %v298, %v349
        %v351 = vpop.f32.mrb[0].mxu0
        %352 = vmatprep.mubr.bf16.mxu0 0
        %353 = vmatmul.mubr.bf16.gmra.mrb[0].mxu0 %v310
        %v354 = vpop.f32.mrb[0].mxu0
        %v355 = vadd.f32 %v298, %v354
        %v356 = vpop.f32.mrb[0].mxu0
        %v357 = vpop.f32.mrb[0].mxu0
        %v358 = vadd.f32 %v298, %v357
        %v359 = vpop.f32.mrb[0].mxu0
        %360 = vdwg.mxu0
        %v361 = vmax.f32 %v347, 0.0
        %v362 = vmax.f32 %v350, 0.0
        %v363 = vmax.f32 %v355, 0.0
        %v364 = vmax.f32 %v358, 0.0
        %v365 = vld [vmem:[%s276] sm:$0xff]
        %v366 = vld [vmem:[%s276 + $0x8] sm:$0xff]
        %v367 = vld [vmem:[%s276 + $0x10] sm:$0xff]
        %v368 = vld [vmem:[%s276 + $0x18] sm:$0xff]
        %v369 = vld [vmem:[#allocation2 + $0x40] sm:$0xf]
        %v370 = vpack.c.bf16 %v366, %v365
        %v371 = vpack.c.bf16 %v368, %v367
        %v372 = vld [vmem:[%s4 + $0x1] sm:$0x1]
        %v373 = vlaneseq
        %v374 = vshrl.u32 %v373, 7
        %v375 = vsub.s32 0, %v374
        %v376 = vrot.slane %v372, %v375
        %vm377 = vcmask 64512
        %v379 = vsel %vm377, %v370, 0
        %v382 = vsel %vm377, %v371, 0
        %vm384 = vcmask 1043456
        %v386 = vsel %vm384, %v369, 0
        %388 = vmatprep.subr.bf16.mxu0 0
        %389 = vmatpush1.bf16.msra.mxu0 %v386
        %390 = vmatprep.subr.bf16.mxu0 0
        %391 = vmatpush1.bf16.msra.mxu0 0
        %392 = vmatprep.subr.bf16.mxu0 0
        %393 = vmatpush1.bf16.msra.mxu0 0
        %394 = vmatprep.subr.bf16.mxu0 0
        %395 = vmatpush1.bf16.msra.mxu0 0
        %396 = vmatprep.subr.bf16.mxu0 0
        %397 = vmatpush1.bf16.msra.mxu0 0
        %398 = vmatprep.subr.bf16.mxu0 0
        %399 = vmatpush1.bf16.msra.mxu0 0
        %400 = vmatprep.subr.bf16.mxu0 0
        %401 = vmatpush1.bf16.msra.mxu0 0
        %402 = vmatprep.subr.bf16.mxu0 0
        %403 = vmatpush1.bf16.msra.mxu0 0
        %404 = vmatprep.subr.bf16.mxu0 0
        %405 = vmatpush1.bf16.msra.mxu0 0
        %406 = vmatprep.subr.bf16.mxu0 0
        %407 = vmatpush1.bf16.msra.mxu0 0
        %408 = vmatprep.subr.bf16.mxu0 0
        %409 = vmatpush1.bf16.msra.mxu0 0
        %410 = vmatprep.subr.bf16.mxu0 0
        %411 = vmatpush1.bf16.msra.mxu0 0
        %412 = vmatprep.subr.bf16.mxu0 0
        %413 = vmatpush1.bf16.msra.mxu0 0
        %414 = vmatprep.subr.bf16.mxu0 0
        %415 = vmatpush1.bf16.msra.mxu0 0
        %416 = vmatprep.subr.bf16.mxu0 0
        %417 = vmatpush1.bf16.msra.mxu0 0
        %418 = vmatprep.subr.bf16.mxu0 0
        %419 = vmatpush1.bf16.msra.mxu0 0
        %420 = vmatprep.mubr.bf16.mxu0 0
        %421 = vmatmul.mubr.bf16.gmra.mrb[0].mxu0 %v379
        %v422 = vpop.f32.mrb[0].mxu0
        %v423 = vadd.f32 %v376, %v422
        %v424 = vpop.f32.mrb[0].mxu0
        %v425 = vpop.f32.mrb[0].mxu0
        %v426 = vadd.f32 %v376, %v425
        %v427 = vpop.f32.mrb[0].mxu0
        %428 = vmatprep.mubr.bf16.mxu0 0
        %429 = vmatmul.mubr.bf16.gmra.mrb[0].mxu0 %v382
        %v430 = vpop.f32.mrb[0].mxu0
        %v431 = vadd.f32 %v376, %v430
        %v432 = vpop.f32.mrb[0].mxu0
        %v433 = vpop.f32.mrb[0].mxu0
        %v434 = vadd.f32 %v376, %v433
        %v435 = vpop.f32.mrb[0].mxu0
        %436 = vdwg.mxu0
        %v437 = vmax.f32 %v423, 0.0
        %v438 = vmax.f32 %v426, 0.0
        %v439 = vmax.f32 %v431, 0.0
        %v440 = vmax.f32 %v434, 0.0
        %v441 = vld [vmem:[#allocation2 + $0x80] sm:$0xf]
        %v442 = vld [vmem:[#allocation2 + $0x84] sm:$0xf]
        %v443 = vld [vmem:[#allocation2 + $0x88] sm:$0xf]
        %v444 = vld [vmem:[#allocation2 + $0x8c] sm:$0xf]
        %v445 = vld [vmem:[#allocation2 + $0x90] sm:$0xf]
        %v446 = vld [vmem:[#allocation2 + $0x94] sm:$0xf]
        %v447 = vld [vmem:[#allocation2 + $0x98] sm:$0xf]
        %v448 = vld [vmem:[#allocation2 + $0x9c] sm:$0xf]
        %v449 = vld [vmem:[#allocation2 + $0xa0] sm:$0xf]
        %v450 = vld [vmem:[#allocation2 + $0xa4] sm:$0xf]
        %v451 = vld [vmem:[#allocation2 + $0xa8] sm:$0xf]
        %v452 = vld [vmem:[#allocation2 + $0xac] sm:$0xf]
        %v453 = vld [vmem:[#allocation2 + $0xb0] sm:$0xf]
        %v454 = vld [vmem:[#allocation2 + $0xb4] sm:$0xf]
        %v455 = vld [vmem:[#allocation2 + $0xb8] sm:$0xf]
        %v456 = vld [vmem:[#allocation2 + $0xbc] sm:$0xf]
        %v457 = vpack.c.bf16 %v362, %v361
        %v458 = vpack.c.bf16 %v364, %v363
        %v459 = vld [vmem:[%s4 + $0x2] sm:$0x1]
        %v460 = vlaneseq
        %v461 = vshrl.u32 %v460, 7
        %v462 = vsub.s32 0, %v461
        %v463 = vrot.slane %v459, %v462
        %v480 = vunpack.c.l.b16 %v441
        %v481 = vunpack.c.l.b16 %v442
        %v482 = vunpack.c.l.b16 %v443
        %v483 = vunpack.c.l.b16 %v444
        %v484 = vunpack.c.l.b16 %v445
        %v485 = vunpack.c.l.b16 %v446
        %v486 = vunpack.c.l.b16 %v447
        %v487 = vunpack.c.l.b16 %v448
        %v488 = vunpack.c.l.b16 %v449
        %v489 = vunpack.c.l.b16 %v450
        %v490 = vunpack.c.l.b16 %v451
        %v491 = vunpack.c.l.b16 %v452
        %v492 = vunpack.c.l.b16 %v453
        %v493 = vunpack.c.l.b16 %v454
        %v494 = vunpack.c.l.b16 %v455
        %v495 = vunpack.c.l.b16 %v456
        %v496 = vpack.c.b16 %v481, %v480
        %v497 = vpack.c.b16 %v483, %v482
        %v498 = vpack.c.b16 %v485, %v484
        %v499 = vpack.c.b16 %v487, %v486
        %v500 = vpack.c.b16 %v489, %v488
        %v501 = vpack.c.b16 %v491, %v490
        %v502 = vpack.c.b16 %v493, %v492
        %v503 = vpack.c.b16 %v495, %v494
        %512 = vmatprep.subr.bf16.mxu0 0
        %513 = vmatpush1.bf16.msra.mxu0 %v496
        %514 = vmatprep.subr.bf16.mxu0 0
        %515 = vmatpush1.bf16.msra.mxu0 %v497
        %516 = vmatprep.subr.bf16.mxu0 0
        %517 = vmatpush1.bf16.msra.mxu0 %v498
        %518 = vmatprep.subr.bf16.mxu0 0
        %519 = vmatpush1.bf16.msra.mxu0 %v499
        %520 = vmatprep.subr.bf16.mxu0 0
        %521 = vmatpush1.bf16.msra.mxu0 %v500
        %522 = vmatprep.subr.bf16.mxu0 0
        %523 = vmatpush1.bf16.msra.mxu0 %v501
        %524 = vmatprep.subr.bf16.mxu0 0
        %525 = vmatpush1.bf16.msra.mxu0 %v502
        %526 = vmatprep.subr.bf16.mxu0 0
        %527 = vmatpush1.bf16.msra.mxu0 %v503
        %528 = vmatprep.subr.bf16.mxu0 0
        %529 = vmatpush1.bf16.msra.mxu0 0
        %530 = vmatprep.subr.bf16.mxu0 0
        %531 = vmatpush1.bf16.msra.mxu0 0
        %532 = vmatprep.subr.bf16.mxu0 0
        %533 = vmatpush1.bf16.msra.mxu0 0
        %534 = vmatprep.subr.bf16.mxu0 0
        %535 = vmatpush1.bf16.msra.mxu0 0
        %536 = vmatprep.subr.bf16.mxu0 0
        %537 = vmatpush1.bf16.msra.mxu0 0
        %538 = vmatprep.subr.bf16.mxu0 0
        %539 = vmatpush1.bf16.msra.mxu0 0
        %540 = vmatprep.subr.bf16.mxu0 0
        %541 = vmatpush1.bf16.msra.mxu0 0
        %542 = vmatprep.subr.bf16.mxu0 0
        %543 = vmatpush1.bf16.msra.mxu0 0
        %544 = vmatprep.mubr.bf16.mxu0 0
        %545 = vmatmul.mubr.bf16.gmra.mrb[0].mxu0 %v457
        %v546 = vpop.f32.mrb[0].mxu0
        %v547 = vadd.f32 %v463, %v546
        %v548 = vpop.f32.mrb[0].mxu0
        %v549 = vpop.f32.mrb[0].mxu0
        %v550 = vadd.f32 %v463, %v549
        %v551 = vpop.f32.mrb[0].mxu0
        %552 = vmatprep.mubr.bf16.mxu0 0
        %553 = vmatmul.mubr.bf16.gmra.mrb[0].mxu0 %v458
        %v554 = vpop.f32.mrb[0].mxu0
        %v555 = vadd.f32 %v463, %v554
        %v556 = vpop.f32.mrb[0].mxu0
        %v557 = vpop.f32.mrb[0].mxu0
        %v558 = vadd.f32 %v463, %v557
        %v559 = vpop.f32.mrb[0].mxu0
        %560 = vdwg.mxu0
        %v561 = vmax.f32 %v547, 0.0
        %v562 = vmax.f32 %v550, 0.0
        %v563 = vmax.f32 %v555, 0.0
        %v564 = vmax.f32 %v558, 0.0
        %v565 = vld [vmem:[#allocation2 + $0xc0] sm:$0xf]
        %v566 = vld [vmem:[#allocation2 + $0xc4] sm:$0xf]
        %v567 = vld [vmem:[#allocation2 + $0xc8] sm:$0xf]
        %v568 = vld [vmem:[#allocation2 + $0xcc] sm:$0xf]
        %v569 = vld [vmem:[#allocation2 + $0xd0] sm:$0xf]
        %v570 = vld [vmem:[#allocation2 + $0xd4] sm:$0xf]
        %v571 = vld [vmem:[#allocation2 + $0xd8] sm:$0xf]
        %v572 = vld [vmem:[#allocation2 + $0xdc] sm:$0xf]
        %v573 = vld [vmem:[#allocation2 + $0xe0] sm:$0xf]
        %v574 = vld [vmem:[#allocation2 + $0xe4] sm:$0xf]
        %v575 = vld [vmem:[#allocation2 + $0xe8] sm:$0xf]
        %v576 = vld [vmem:[#allocation2 + $0xec] sm:$0xf]
        %v577 = vld [vmem:[#allocation2 + $0xf0] sm:$0xf]
        %v578 = vld [vmem:[#allocation2 + $0xf4] sm:$0xf]
        %v579 = vld [vmem:[#allocation2 + $0xf8] sm:$0xf]
        %v580 = vld [vmem:[#allocation2 + $0xfc] sm:$0xf]
        %v581 = vpack.c.bf16 %v438, %v437
        %v582 = vpack.c.bf16 %v440, %v439
        %v583 = vld [vmem:[%s4 + $0x3] sm:$0x1]
        %v584 = vlaneseq
        %v585 = vshrl.u32 %v584, 7
        %v586 = vsub.s32 0, %v585
        %v587 = vrot.slane %v583, %v586
        %v604 = vunpack.c.l.b16 %v565
        %v605 = vunpack.c.l.b16 %v566
        %v606 = vunpack.c.l.b16 %v567
        %v607 = vunpack.c.l.b16 %v568
        %v608 = vunpack.c.l.b16 %v569
        %v609 = vunpack.c.l.b16 %v570
        %v610 = vunpack.c.l.b16 %v571
        %v611 = vunpack.c.l.b16 %v572
        %v612 = vunpack.c.l.b16 %v573
        %v613 = vunpack.c.l.b16 %v574
        %v614 = vunpack.c.l.b16 %v575
        %v615 = vunpack.c.l.b16 %v576
        %v616 = vunpack.c.l.b16 %v577
        %v617 = vunpack.c.l.b16 %v578
        %v618 = vunpack.c.l.b16 %v579
        %v619 = vunpack.c.l.b16 %v580
        %v620 = vpack.c.b16 %v605, %v604
        %v621 = vpack.c.b16 %v607, %v606
        %v622 = vpack.c.b16 %v609, %v608
        %v623 = vpack.c.b16 %v611, %v610
        %v624 = vpack.c.b16 %v613, %v612
        %v625 = vpack.c.b16 %v615, %v614
        %v626 = vpack.c.b16 %v617, %v616
        %v627 = vpack.c.b16 %v619, %v618
        %636 = vmatprep.subr.bf16.mxu0 0
        %637 = vmatpush1.bf16.msra.mxu0 %v620
        %638 = vmatprep.subr.bf16.mxu0 0
        %639 = vmatpush1.bf16.msra.mxu0 %v621
        %640 = vmatprep.subr.bf16.mxu0 0
        %641 = vmatpush1.bf16.msra.mxu0 %v622
        %642 = vmatprep.subr.bf16.mxu0 0
        %643 = vmatpush1.bf16.msra.mxu0 %v623
        %644 = vmatprep.subr.bf16.mxu0 0
        %645 = vmatpush1.bf16.msra.mxu0 %v624
        %646 = vmatprep.subr.bf16.mxu0 0
        %647 = vmatpush1.bf16.msra.mxu0 %v625
        %648 = vmatprep.subr.bf16.mxu0 0
        %649 = vmatpush1.bf16.msra.mxu0 %v626
        %650 = vmatprep.subr.bf16.mxu0 0
        %651 = vmatpush1.bf16.msra.mxu0 %v627
        %652 = vmatprep.subr.bf16.mxu0 0
        %653 = vmatpush1.bf16.msra.mxu0 0
        %654 = vmatprep.subr.bf16.mxu0 0
        %655 = vmatpush1.bf16.msra.mxu0 0
        %656 = vmatprep.subr.bf16.mxu0 0
        %657 = vmatpush1.bf16.msra.mxu0 0
        %658 = vmatprep.subr.bf16.mxu0 0
        %659 = vmatpush1.bf16.msra.mxu0 0
        %660 = vmatprep.subr.bf16.mxu0 0
        %661 = vmatpush1.bf16.msra.mxu0 0
        %662 = vmatprep.subr.bf16.mxu0 0
        %663 = vmatpush1.bf16.msra.mxu0 0
        %664 = vmatprep.subr.bf16.mxu0 0
        %665 = vmatpush1.bf16.msra.mxu0 0
        %666 = vmatprep.subr.bf16.mxu0 0
        %667 = vmatpush1.bf16.msra.mxu0 0
        %668 = vmatprep.mubr.bf16.mxu0 0
        %669 = vmatmul.mubr.bf16.gmra.mrb[0].mxu0 %v581
        %v670 = vpop.f32.mrb[0].mxu0
        %v671 = vadd.f32 %v587, %v670
        %v672 = vpop.f32.mrb[0].mxu0
        %v673 = vpop.f32.mrb[0].mxu0
        %v674 = vadd.f32 %v587, %v673
        %v675 = vpop.f32.mrb[0].mxu0
        %676 = vmatprep.mubr.bf16.mxu0 0
        %677 = vmatmul.mubr.bf16.gmra.mrb[0].mxu0 %v582
        %v678 = vpop.f32.mrb[0].mxu0
        %v679 = vadd.f32 %v587, %v678
        %v680 = vpop.f32.mrb[0].mxu0
        %v681 = vpop.f32.mrb[0].mxu0
        %v682 = vadd.f32 %v587, %v681
        %v683 = vpop.f32.mrb[0].mxu0
        %684 = vdwg.mxu0
        %v685 = vmax.f32 %v671, 0.0
        %v686 = vmax.f32 %v674, 0.0
        %v687 = vmax.f32 %v679, 0.0
        %v688 = vmax.f32 %v682, 0.0
        %v689 = vld [vmem:[#allocation2 + $0x100] sm:$0xf]
        %v690 = vld [vmem:[#allocation2 + $0x104] sm:$0xf]
        %v691 = vld [vmem:[#allocation2 + $0x108] sm:$0xf]
        %v692 = vld [vmem:[#allocation2 + $0x10c] sm:$0xf]
        %v693 = vld [vmem:[#allocation2 + $0x110] sm:$0xf]
        %v694 = vld [vmem:[#allocation2 + $0x114] sm:$0xf]
        %v695 = vld [vmem:[#allocation2 + $0x118] sm:$0xf]
        %v696 = vld [vmem:[#allocation2 + $0x11c] sm:$0xf]
        %v697 = vld [vmem:[#allocation2 + $0x120] sm:$0xf]
        %v698 = vld [vmem:[#allocation2 + $0x124] sm:$0xf]
        %v699 = vld [vmem:[#allocation2 + $0x128] sm:$0xf]
        %v700 = vld [vmem:[#allocation2 + $0x12c] sm:$0xf]
        %v701 = vld [vmem:[#allocation2 + $0x130] sm:$0xf]
        %v702 = vld [vmem:[#allocation2 + $0x134] sm:$0xf]
        %v703 = vld [vmem:[#allocation2 + $0x138] sm:$0xf]
        %v704 = vld [vmem:[#allocation2 + $0x13c] sm:$0xf]
        %v705 = vpack.c.bf16 %v562, %v561
        %v706 = vpack.c.bf16 %v564, %v563
        %v707 = vld [vmem:[%s4 + $0x4] sm:$0x1]
        %v708 = vlaneseq
        %v709 = vshrl.u32 %v708, 7
        %v710 = vsub.s32 0, %v709
        %v711 = vrot.slane %v707, %v710
        %v728 = vunpack.c.l.b16 %v689
        %v729 = vunpack.c.l.b16 %v690
        %v730 = vunpack.c.l.b16 %v691
        %v731 = vunpack.c.l.b16 %v692
        %v732 = vunpack.c.l.b16 %v693
        %v733 = vunpack.c.l.b16 %v694
        %v734 = vunpack.c.l.b16 %v695
        %v735 = vunpack.c.l.b16 %v696
        %v736 = vunpack.c.l.b16 %v697
        %v737 = vunpack.c.l.b16 %v698
        %v738 = vunpack.c.l.b16 %v699
        %v739 = vunpack.c.l.b16 %v700
        %v740 = vunpack.c.l.b16 %v701
        %v741 = vunpack.c.l.b16 %v702
        %v742 = vunpack.c.l.b16 %v703
        %v743 = vunpack.c.l.b16 %v704
        %v744 = vpack.c.b16 %v729, %v728
        %v745 = vpack.c.b16 %v731, %v730
        %v746 = vpack.c.b16 %v733, %v732
        %v747 = vpack.c.b16 %v735, %v734
        %v748 = vpack.c.b16 %v737, %v736
        %v749 = vpack.c.b16 %v739, %v738
        %v750 = vpack.c.b16 %v741, %v740
        %v751 = vpack.c.b16 %v743, %v742
        %760 = vmatprep.subr.bf16.mxu0 0
        %761 = vmatpush1.bf16.msra.mxu0 %v744
        %762 = vmatprep.subr.bf16.mxu0 0
        %763 = vmatpush1.bf16.msra.mxu0 %v745
        %764 = vmatprep.subr.bf16.mxu0 0
        %765 = vmatpush1.bf16.msra.mxu0 %v746
        %766 = vmatprep.subr.bf16.mxu0 0
        %767 = vmatpush1.bf16.msra.mxu0 %v747
        %768 = vmatprep.subr.bf16.mxu0 0
        %769 = vmatpush1.bf16.msra.mxu0 %v748
        %770 = vmatprep.subr.bf16.mxu0 0
        %771 = vmatpush1.bf16.msra.mxu0 %v749
        %772 = vmatprep.subr.bf16.mxu0 0
        %773 = vmatpush1.bf16.msra.mxu0 %v750
        %774 = vmatprep.subr.bf16.mxu0 0
        %775 = vmatpush1.bf16.msra.mxu0 %v751
        %776 = vmatprep.subr.bf16.mxu0 0
        %777 = vmatpush1.bf16.msra.mxu0 0
        %778 = vmatprep.subr.bf16.mxu0 0
        %779 = vmatpush1.bf16.msra.mxu0 0
        %780 = vmatprep.subr.bf16.mxu0 0
        %781 = vmatpush1.bf16.msra.mxu0 0
        %782 = vmatprep.subr.bf16.mxu0 0
        %783 = vmatpush1.bf16.msra.mxu0 0
        %784 = vmatprep.subr.bf16.mxu0 0
        %785 = vmatpush1.bf16.msra.mxu0 0
        %786 = vmatprep.subr.bf16.mxu0 0
        %787 = vmatpush1.bf16.msra.mxu0 0
        %788 = vmatprep.subr.bf16.mxu0 0
        %789 = vmatpush1.bf16.msra.mxu0 0
        %790 = vmatprep.subr.bf16.mxu0 0
        %791 = vmatpush1.bf16.msra.mxu0 0
        %792 = vmatprep.mubr.bf16.mxu0 0
        %793 = vmatmul.mubr.bf16.gmra.mrb[0].mxu0 %v705
        %v794 = vpop.f32.mrb[0].mxu0
        %v795 = vadd.f32 %v711, %v794
        %v796 = vpop.f32.mrb[0].mxu0
        %v797 = vpop.f32.mrb[0].mxu0
        %v798 = vadd.f32 %v711, %v797
        %v799 = vpop.f32.mrb[0].mxu0
        %800 = vmatprep.mubr.bf16.mxu0 0
        %801 = vmatmul.mubr.bf16.gmra.mrb[0].mxu0 %v706
        %v802 = vpop.f32.mrb[0].mxu0
        %v803 = vadd.f32 %v711, %v802
        %v804 = vpop.f32.mrb[0].mxu0
        %v805 = vpop.f32.mrb[0].mxu0
        %v806 = vadd.f32 %v711, %v805
        %v807 = vpop.f32.mrb[0].mxu0
        %808 = vdwg.mxu0
        %v809 = vld [vmem:[#allocation2 + $0x140] sm:$0xf]
        %v810 = vld [vmem:[#allocation2 + $0x144] sm:$0xf]
        %v811 = vld [vmem:[#allocation2 + $0x148] sm:$0xf]
        %v812 = vld [vmem:[#allocation2 + $0x14c] sm:$0xf]
        %v813 = vld [vmem:[#allocation2 + $0x150] sm:$0xf]
        %v814 = vld [vmem:[#allocation2 + $0x154] sm:$0xf]
        %v815 = vld [vmem:[#allocation2 + $0x158] sm:$0xf]
        %v816 = vld [vmem:[#allocation2 + $0x15c] sm:$0xf]
        %v817 = vld [vmem:[#allocation2 + $0x160] sm:$0xf]
        %v818 = vld [vmem:[#allocation2 + $0x164] sm:$0xf]
        %v819 = vld [vmem:[#allocation2 + $0x168] sm:$0xf]
        %v820 = vld [vmem:[#allocation2 + $0x16c] sm:$0xf]
        %v821 = vld [vmem:[#allocation2 + $0x170] sm:$0xf]
        %v822 = vld [vmem:[#allocation2 + $0x174] sm:$0xf]
        %v823 = vld [vmem:[#allocation2 + $0x178] sm:$0xf]
        %v824 = vld [vmem:[#allocation2 + $0x17c] sm:$0xf]
        %v825 = vpack.c.bf16 %v686, %v685
        %v826 = vpack.c.bf16 %v688, %v687
        %v843 = vunpack.c.l.b16 %v809
        %v844 = vunpack.c.l.b16 %v810
        %v845 = vunpack.c.l.b16 %v811
        %v846 = vunpack.c.l.b16 %v812
        %v847 = vunpack.c.l.b16 %v813
        %v848 = vunpack.c.l.b16 %v814
        %v849 = vunpack.c.l.b16 %v815
        %v850 = vunpack.c.l.b16 %v816
        %v851 = vunpack.c.l.b16 %v817
        %v852 = vunpack.c.l.b16 %v818
        %v853 = vunpack.c.l.b16 %v819
        %v854 = vunpack.c.l.b16 %v820
        %v855 = vunpack.c.l.b16 %v821
        %v856 = vunpack.c.l.b16 %v822
        %v857 = vunpack.c.l.b16 %v823
        %v858 = vunpack.c.l.b16 %v824
        %v859 = vpack.c.b16 %v844, %v843
        %v860 = vpack.c.b16 %v846, %v845
        %v861 = vpack.c.b16 %v848, %v847
        %v862 = vpack.c.b16 %v850, %v849
        %v863 = vpack.c.b16 %v852, %v851
        %v864 = vpack.c.b16 %v854, %v853
        %v865 = vpack.c.b16 %v856, %v855
        %v866 = vpack.c.b16 %v858, %v857
        %875 = vmatprep.subr.bf16.mxu0 0
        %876 = vmatpush1.bf16.msra.mxu0 %v859
        %877 = vmatprep.subr.bf16.mxu0 0
        %878 = vmatpush1.bf16.msra.mxu0 %v860
        %879 = vmatprep.subr.bf16.mxu0 0
        %880 = vmatpush1.bf16.msra.mxu0 %v861
        %881 = vmatprep.subr.bf16.mxu0 0
        %882 = vmatpush1.bf16.msra.mxu0 %v862
        %883 = vmatprep.subr.bf16.mxu0 0
        %884 = vmatpush1.bf16.msra.mxu0 %v863
        %885 = vmatprep.subr.bf16.mxu0 0
        %886 = vmatpush1.bf16.msra.mxu0 %v864
        %887 = vmatprep.subr.bf16.mxu0 0
        %888 = vmatpush1.bf16.msra.mxu0 %v865
        %889 = vmatprep.subr.bf16.mxu0 0
        %890 = vmatpush1.bf16.msra.mxu0 %v866
        %891 = vmatprep.subr.bf16.mxu0 0
        %892 = vmatpush1.bf16.msra.mxu0 0
        %893 = vmatprep.subr.bf16.mxu0 0
        %894 = vmatpush1.bf16.msra.mxu0 0
        %895 = vmatprep.subr.bf16.mxu0 0
        %896 = vmatpush1.bf16.msra.mxu0 0
        %897 = vmatprep.subr.bf16.mxu0 0
        %898 = vmatpush1.bf16.msra.mxu0 0
        %899 = vmatprep.subr.bf16.mxu0 0
        %900 = vmatpush1.bf16.msra.mxu0 0
        %901 = vmatprep.subr.bf16.mxu0 0
        %902 = vmatpush1.bf16.msra.mxu0 0
        %903 = vmatprep.subr.bf16.mxu0 0
        %904 = vmatpush1.bf16.msra.mxu0 0
        %905 = vmatprep.subr.bf16.mxu0 0
        %906 = vmatpush1.bf16.msra.mxu0 0
        %907 = vmatprep.mubr.bf16.mxu0 0
        %908 = vmatmul.mubr.bf16.gmra.mrb[0].mxu0 %v825
        %v909 = vpop.f32.mrb[0].mxu0
        %v910 = vadd.f32 %v795, %v909
        %v911 = vpop.f32.mrb[0].mxu0
        %v912 = vpop.f32.mrb[0].mxu0
        %v913 = vadd.f32 %v798, %v912
        %v914 = vpop.f32.mrb[0].mxu0
        %915 = vmatprep.mubr.bf16.mxu0 0
        %916 = vmatmul.mubr.bf16.gmra.mrb[0].mxu0 %v826
        %v917 = vpop.f32.mrb[0].mxu0
        %v918 = vadd.f32 %v803, %v917
        %v919 = vpop.f32.mrb[0].mxu0
        %v920 = vpop.f32.mrb[0].mxu0
        %v921 = vadd.f32 %v806, %v920
        %v922 = vpop.f32.mrb[0].mxu0
        %923 = vdwg.mxu0
        %v924 = vld [vmem:[%s4 + $0x5] sm:$0x1]
        %v925 = vlaneseq
        %v926 = vshrl.u32 %v925, 7
        %v927 = vsub.s32 0, %v926
        %v928 = vrot.slane %v924, %v927
        %v929 = vadd.f32 %v910, %v928
        %v930 = vadd.f32 %v913, %v928
        %v931 = vadd.f32 %v918, %v928
        %v932 = vadd.f32 %v921, %v928
        %v933 = vmax.f32 %v929, 0.0
        %v934 = vmax.f32 %v930, 0.0
        %v935 = vmax.f32 %v931, 0.0
        %v936 = vmax.f32 %v932, 0.0
        %v937 = vld [vmem:[#allocation2 + $0x180] sm:$0xf]
        %v938 = vld [vmem:[#allocation2 + $0x184] sm:$0xf]
        %v939 = vld [vmem:[#allocation2 + $0x188] sm:$0xf]
        %v940 = vld [vmem:[#allocation2 + $0x18c] sm:$0xf]
        %v941 = vld [vmem:[#allocation2 + $0x190] sm:$0xf]
        %v942 = vld [vmem:[#allocation2 + $0x194] sm:$0xf]
        %v943 = vld [vmem:[#allocation2 + $0x198] sm:$0xf]
        %v944 = vld [vmem:[#allocation2 + $0x19c] sm:$0xf]
        %v945 = vld [vmem:[#allocation2 + $0x1a0] sm:$0xf]
        %v946 = vld [vmem:[#allocation2 + $0x1a4] sm:$0xf]
        %v947 = vld [vmem:[#allocation2 + $0x1a8] sm:$0xf]
        %v948 = vld [vmem:[#allocation2 + $0x1ac] sm:$0xf]
        %v949 = vld [vmem:[#allocation2 + $0x1b0] sm:$0xf]
        %v950 = vld [vmem:[#allocation2 + $0x1b4] sm:$0xf]
        %v951 = vld [vmem:[#allocation2 + $0x1b8] sm:$0xf]
        %v952 = vld [vmem:[#allocation2 + $0x1bc] sm:$0xf]
        %v953 = vpack.c.bf16 %v934, %v933
        %v954 = vpack.c.bf16 %v936, %v935
        %v955 = vld [vmem:[%s4 + $0x6] sm:$0x1]
        %v956 = vlaneseq
        %v957 = vshrl.u32 %v956, 7
        %v958 = vsub.s32 0, %v957
        %v959 = vrot.slane %v955, %v958
        %v976 = vunpack.c.l.b16 %v937
        %v977 = vunpack.c.l.b16 %v938
        %v978 = vunpack.c.l.b16 %v939
        %v979 = vunpack.c.l.b16 %v940
        %v980 = vunpack.c.l.b16 %v941
        %v981 = vunpack.c.l.b16 %v942
        %v982 = vunpack.c.l.b16 %v943
        %v983 = vunpack.c.l.b16 %v944
        %v984 = vunpack.c.l.b16 %v945
        %v985 = vunpack.c.l.b16 %v946
        %v986 = vunpack.c.l.b16 %v947
        %v987 = vunpack.c.l.b16 %v948
        %v988 = vunpack.c.l.b16 %v949
        %v989 = vunpack.c.l.b16 %v950
        %v990 = vunpack.c.l.b16 %v951
        %v991 = vunpack.c.l.b16 %v952
        %v992 = vpack.c.b16 %v977, %v976
        %v993 = vpack.c.b16 %v979, %v978
        %v994 = vpack.c.b16 %v981, %v980
        %v995 = vpack.c.b16 %v983, %v982
        %v996 = vpack.c.b16 %v985, %v984
        %v997 = vpack.c.b16 %v987, %v986
        %v998 = vpack.c.b16 %v989, %v988
        %v999 = vpack.c.b16 %v991, %v990
        %1008 = vmatprep.subr.bf16.mxu0 0
        %1009 = vmatpush1.bf16.msra.mxu0 %v992
        %1010 = vmatprep.subr.bf16.mxu0 0
        %1011 = vmatpush1.bf16.msra.mxu0 %v993
        %1012 = vmatprep.subr.bf16.mxu0 0
        %1013 = vmatpush1.bf16.msra.mxu0 %v994
        %1014 = vmatprep.subr.bf16.mxu0 0
        %1015 = vmatpush1.bf16.msra.mxu0 %v995
        %1016 = vmatprep.subr.bf16.mxu0 0
        %1017 = vmatpush1.bf16.msra.mxu0 %v996
        %1018 = vmatprep.subr.bf16.mxu0 0
        %1019 = vmatpush1.bf16.msra.mxu0 %v997
        %1020 = vmatprep.subr.bf16.mxu0 0
        %1021 = vmatpush1.bf16.msra.mxu0 %v998
        %1022 = vmatprep.subr.bf16.mxu0 0
        %1023 = vmatpush1.bf16.msra.mxu0 %v999
        %1024 = vmatprep.subr.bf16.mxu0 0
        %1025 = vmatpush1.bf16.msra.mxu0 0
        %1026 = vmatprep.subr.bf16.mxu0 0
        %1027 = vmatpush1.bf16.msra.mxu0 0
        %1028 = vmatprep.subr.bf16.mxu0 0
        %1029 = vmatpush1.bf16.msra.mxu0 0
        %1030 = vmatprep.subr.bf16.mxu0 0
        %1031 = vmatpush1.bf16.msra.mxu0 0
        %1032 = vmatprep.subr.bf16.mxu0 0
        %1033 = vmatpush1.bf16.msra.mxu0 0
        %1034 = vmatprep.subr.bf16.mxu0 0
        %1035 = vmatpush1.bf16.msra.mxu0 0
        %1036 = vmatprep.subr.bf16.mxu0 0
        %1037 = vmatpush1.bf16.msra.mxu0 0
        %1038 = vmatprep.subr.bf16.mxu0 0
        %1039 = vmatpush1.bf16.msra.mxu0 0
        %1040 = vmatprep.mubr.bf16.mxu0 0
        %1041 = vmatmul.mubr.bf16.gmra.mrb[0].mxu0 %v953
        %v1042 = vpop.f32.mrb[0].mxu0
        %v1043 = vadd.f32 %v959, %v1042
        %v1044 = vpop.f32.mrb[0].mxu0
        %v1045 = vpop.f32.mrb[0].mxu0
        %v1046 = vadd.f32 %v959, %v1045
        %v1047 = vpop.f32.mrb[0].mxu0
        %1048 = vmatprep.mubr.bf16.mxu0 0
        %1049 = vmatmul.mubr.bf16.gmra.mrb[0].mxu0 %v954
        %v1050 = vpop.f32.mrb[0].mxu0
        %v1051 = vadd.f32 %v959, %v1050
        %v1052 = vpop.f32.mrb[0].mxu0
        %v1053 = vpop.f32.mrb[0].mxu0
        %v1054 = vadd.f32 %v959, %v1053
        %v1055 = vpop.f32.mrb[0].mxu0
        %1056 = vdwg.mxu0
        %v1057 = vld [vmem:[#allocation2 + $0x1c0] sm:$0xf]
        %v1058 = vld [vmem:[#allocation2 + $0x1c4] sm:$0xf]
        %v1059 = vld [vmem:[#allocation2 + $0x1c8] sm:$0xf]
        %v1060 = vld [vmem:[#allocation2 + $0x1cc] sm:$0xf]
        %v1061 = vld [vmem:[#allocation2 + $0x1d0] sm:$0xf]
        %v1062 = vld [vmem:[#allocation2 + $0x1d4] sm:$0xf]
        %v1063 = vld [vmem:[#allocation2 + $0x1d8] sm:$0xf]
        %v1064 = vld [vmem:[#allocation2 + $0x1dc] sm:$0xf]
        %v1065 = vld [vmem:[#allocation2 + $0x1e0] sm:$0xf]
        %v1066 = vld [vmem:[#allocation2 + $0x1e4] sm:$0xf]
        %v1067 = vld [vmem:[#allocation2 + $0x1e8] sm:$0xf]
        %v1068 = vld [vmem:[#allocation2 + $0x1ec] sm:$0xf]
        %v1069 = vld [vmem:[#allocation2 + $0x1f0] sm:$0xf]
        %v1070 = vld [vmem:[#allocation2 + $0x1f4] sm:$0xf]
        %v1071 = vld [vmem:[#allocation2 + $0x1f8] sm:$0xf]
        %v1072 = vld [vmem:[#allocation2 + $0x1fc] sm:$0xf]
        %v1073 = vld [vmem:[%s4 + $0x7] sm:$0x1]
        %v1074 = vlaneseq
        %v1075 = vshrl.u32 %v1074, 7
        %v1076 = vsub.s32 0, %v1075
        %v1077 = vrot.slane %v1073, %v1076
        %v1094 = vunpack.c.l.b16 %v1057
        %v1095 = vunpack.c.l.b16 %v1058
        %v1096 = vunpack.c.l.b16 %v1059
        %v1097 = vunpack.c.l.b16 %v1060
        %v1098 = vunpack.c.l.b16 %v1061
        %v1099 = vunpack.c.l.b16 %v1062
        %v1100 = vunpack.c.l.b16 %v1063
        %v1101 = vunpack.c.l.b16 %v1064
        %v1102 = vunpack.c.l.b16 %v1065
        %v1103 = vunpack.c.l.b16 %v1066
        %v1104 = vunpack.c.l.b16 %v1067
        %v1105 = vunpack.c.l.b16 %v1068
        %v1106 = vunpack.c.l.b16 %v1069
        %v1107 = vunpack.c.l.b16 %v1070
        %v1108 = vunpack.c.l.b16 %v1071
        %v1109 = vunpack.c.l.b16 %v1072
        %v1110 = vpack.c.b16 %v1095, %v1094
        %v1111 = vpack.c.b16 %v1097, %v1096
        %v1112 = vpack.c.b16 %v1099, %v1098
        %v1113 = vpack.c.b16 %v1101, %v1100
        %v1114 = vpack.c.b16 %v1103, %v1102
        %v1115 = vpack.c.b16 %v1105, %v1104
        %v1116 = vpack.c.b16 %v1107, %v1106
        %v1117 = vpack.c.b16 %v1109, %v1108
        %1126 = vmatprep.subr.bf16.mxu0 0
        %1127 = vmatpush1.bf16.msra.mxu0 %v1110
        %1128 = vmatprep.subr.bf16.mxu0 0
        %1129 = vmatpush1.bf16.msra.mxu0 %v1111
        %1130 = vmatprep.subr.bf16.mxu0 0
        %1131 = vmatpush1.bf16.msra.mxu0 %v1112
        %1132 = vmatprep.subr.bf16.mxu0 0
        %1133 = vmatpush1.bf16.msra.mxu0 %v1113
        %1134 = vmatprep.subr.bf16.mxu0 0
        %1135 = vmatpush1.bf16.msra.mxu0 %v1114
        %1136 = vmatprep.subr.bf16.mxu0 0
        %1137 = vmatpush1.bf16.msra.mxu0 %v1115
        %1138 = vmatprep.subr.bf16.mxu0 0
        %1139 = vmatpush1.bf16.msra.mxu0 %v1116
        %1140 = vmatprep.subr.bf16.mxu0 0
        %1141 = vmatpush1.bf16.msra.mxu0 %v1117
        %1142 = vmatprep.subr.bf16.mxu0 0
        %1143 = vmatpush1.bf16.msra.mxu0 0
        %1144 = vmatprep.subr.bf16.mxu0 0
        %1145 = vmatpush1.bf16.msra.mxu0 0
        %1146 = vmatprep.subr.bf16.mxu0 0
        %1147 = vmatpush1.bf16.msra.mxu0 0
        %1148 = vmatprep.subr.bf16.mxu0 0
        %1149 = vmatpush1.bf16.msra.mxu0 0
        %1150 = vmatprep.subr.bf16.mxu0 0
        %1151 = vmatpush1.bf16.msra.mxu0 0
        %1152 = vmatprep.subr.bf16.mxu0 0
        %1153 = vmatpush1.bf16.msra.mxu0 0
        %1154 = vmatprep.subr.bf16.mxu0 0
        %1155 = vmatpush1.bf16.msra.mxu0 0
        %1156 = vmatprep.subr.bf16.mxu0 0
        %1157 = vmatpush1.bf16.msra.mxu0 0
        %1158 = vmatprep.mubr.bf16.mxu0 0
        %1159 = vmatmul.mubr.bf16.gmra.mrb[0].mxu0 %v953
        %v1160 = vpop.f32.mrb[0].mxu0
        %v1161 = vadd.f32 %v1077, %v1160
        %v1162 = vpop.f32.mrb[0].mxu0
        %v1163 = vpop.f32.mrb[0].mxu0
        %v1164 = vadd.f32 %v1077, %v1163
        %v1165 = vpop.f32.mrb[0].mxu0
        %1166 = vmatprep.mubr.bf16.mxu0 0
        %1167 = vmatmul.mubr.bf16.gmra.mrb[0].mxu0 %v954
        %v1168 = vpop.f32.mrb[0].mxu0
        %v1169 = vadd.f32 %v1077, %v1168
        %v1170 = vpop.f32.mrb[0].mxu0
        %v1171 = vpop.f32.mrb[0].mxu0
        %v1172 = vadd.f32 %v1077, %v1171
        %v1173 = vpop.f32.mrb[0].mxu0
        %1174 = vdwg.mxu0
        %v1175 = vld [vmem:[%s282] sm:$0xff]
        %v1176 = vld [vmem:[%s282 + $0x8] sm:$0xff]
        %v1177 = vld [vmem:[%s282 + $0x10] sm:$0xff]
        %v1178 = vld [vmem:[%s282 + $0x18] sm:$0xff]
        %v1179 = vmul.f32 %v1161, 0.5
        %v1180 = vmul.f32 %v1164, 0.5
        %v1181 = vmul.f32 %v1169, 0.5
        %v1182 = vmul.f32 %v1172, 0.5
        %v1183 = vmul.f32 %v1179, 1.442695
        %v1184 = vpow.pop %v1183
        %v1185 = vmul.f32 %v1180, 1.442695
        %v1186 = vpow.pop %v1185
        %v1187 = vmul.f32 %v1181, 1.442695
        %v1188 = vpow.pop %v1187
        %v1189 = vmul.f32 %v1182, 1.442695
        %v1190 = vpow.pop %v1189
        %v1191 = vmul.f32 %v1175, %v1184
        %v1192 = vmul.f32 %v1176, %v1186
        %v1193 = vmul.f32 %v1177, %v1188
        %v1194 = vmul.f32 %v1178, %v1190
        %v1195 = vadd.f32 %v1043, %v1191
        %v1196 = vadd.f32 %v1046, %v1192
        %v1197 = vadd.f32 %v1051, %v1193
        %v1198 = vadd.f32 %v1054, %v1194
        %v1199 = vld [vmem:[#allocation2 + $0x200] sm:$0xf]
        %v1200 = vld [vmem:[#allocation2 + $0x204] sm:$0xf]
        %v1201 = vld [vmem:[#allocation2 + $0x208] sm:$0xf]
        %v1202 = vld [vmem:[#allocation2 + $0x20c] sm:$0xf]
        %v1203 = vld [vmem:[#allocation2 + $0x210] sm:$0xf]
        %v1204 = vld [vmem:[#allocation2 + $0x214] sm:$0xf]
        %v1205 = vld [vmem:[#allocation2 + $0x218] sm:$0xf]
        %v1206 = vld [vmem:[#allocation2 + $0x21c] sm:$0xf]
        %v1207 = vld [vmem:[#allocation2 + $0x220] sm:$0xf]
        %v1208 = vld [vmem:[#allocation2 + $0x224] sm:$0xf]
        %v1209 = vld [vmem:[#allocation2 + $0x228] sm:$0xf]
        %v1210 = vld [vmem:[#allocation2 + $0x22c] sm:$0xf]
        %v1211 = vld [vmem:[#allocation2 + $0x230] sm:$0xf]
        %v1212 = vld [vmem:[#allocation2 + $0x234] sm:$0xf]
        %v1213 = vld [vmem:[#allocation2 + $0x238] sm:$0xf]
        %v1214 = vld [vmem:[#allocation2 + $0x23c] sm:$0xf]
        %v1215 = vpack.c.bf16 %v1196, %v1195
        %v1216 = vpack.c.bf16 %v1198, %v1197
        %v1217 = vld [vmem:[%s4 + $0x8] sm:$0x1]
        %v1218 = vlaneseq
        %v1219 = vshrl.u32 %v1218, 7
        %v1220 = vsub.s32 0, %v1219
        %v1221 = vrot.slane %v1217, %v1220
        %v1238 = vunpack.c.l.b16 %v1199
        %v1239 = vunpack.c.l.b16 %v1200
        %v1240 = vunpack.c.l.b16 %v1201
        %v1241 = vunpack.c.l.b16 %v1202
        %v1242 = vunpack.c.l.b16 %v1203
        %v1243 = vunpack.c.l.b16 %v1204
        %v1244 = vunpack.c.l.b16 %v1205
        %v1245 = vunpack.c.l.b16 %v1206
        %v1246 = vunpack.c.l.b16 %v1207
        %v1247 = vunpack.c.l.b16 %v1208
        %v1248 = vunpack.c.l.b16 %v1209
        %v1249 = vunpack.c.l.b16 %v1210
        %v1250 = vunpack.c.l.b16 %v1211
        %v1251 = vunpack.c.l.b16 %v1212
        %v1252 = vunpack.c.l.b16 %v1213
        %v1253 = vunpack.c.l.b16 %v1214
        %v1254 = vpack.c.b16 %v1239, %v1238
        %v1255 = vpack.c.b16 %v1241, %v1240
        %v1256 = vpack.c.b16 %v1243, %v1242
        %v1257 = vpack.c.b16 %v1245, %v1244
        %v1258 = vpack.c.b16 %v1247, %v1246
        %v1259 = vpack.c.b16 %v1249, %v1248
        %v1260 = vpack.c.b16 %v1251, %v1250
        %v1261 = vpack.c.b16 %v1253, %v1252
        %1270 = vmatprep.subr.bf16.mxu0 0
        %1271 = vmatpush1.bf16.msra.mxu0 %v1254
        %1272 = vmatprep.subr.bf16.mxu0 0
        %1273 = vmatpush1.bf16.msra.mxu0 %v1255
        %1274 = vmatprep.subr.bf16.mxu0 0
        %1275 = vmatpush1.bf16.msra.mxu0 %v1256
        %1276 = vmatprep.subr.bf16.mxu0 0
        %1277 = vmatpush1.bf16.msra.mxu0 %v1257
        %1278 = vmatprep.subr.bf16.mxu0 0
        %1279 = vmatpush1.bf16.msra.mxu0 %v1258
        %1280 = vmatprep.subr.bf16.mxu0 0
        %1281 = vmatpush1.bf16.msra.mxu0 %v1259
        %1282 = vmatprep.subr.bf16.mxu0 0
        %1283 = vmatpush1.bf16.msra.mxu0 %v1260
        %1284 = vmatprep.subr.bf16.mxu0 0
        %1285 = vmatpush1.bf16.msra.mxu0 %v1261
        %1286 = vmatprep.subr.bf16.mxu0 0
        %1287 = vmatpush1.bf16.msra.mxu0 0
        %1288 = vmatprep.subr.bf16.mxu0 0
        %1289 = vmatpush1.bf16.msra.mxu0 0
        %1290 = vmatprep.subr.bf16.mxu0 0
        %1291 = vmatpush1.bf16.msra.mxu0 0
        %1292 = vmatprep.subr.bf16.mxu0 0
        %1293 = vmatpush1.bf16.msra.mxu0 0
        %1294 = vmatprep.subr.bf16.mxu0 0
        %1295 = vmatpush1.bf16.msra.mxu0 0
        %1296 = vmatprep.subr.bf16.mxu0 0
        %1297 = vmatpush1.bf16.msra.mxu0 0
        %1298 = vmatprep.subr.bf16.mxu0 0
        %1299 = vmatpush1.bf16.msra.mxu0 0
        %1300 = vmatprep.subr.bf16.mxu0 0
        %1301 = vmatpush1.bf16.msra.mxu0 0
        %1302 = vmatprep.mubr.bf16.mxu0 0
        %1303 = vmatmul.mubr.bf16.gmra.mrb[0].mxu0 %v1215
        %v1304 = vpop.f32.mrb[0].mxu0
        %v1305 = vadd.f32 %v1221, %v1304
        %v1306 = vpop.f32.mrb[0].mxu0
        %v1307 = vpop.f32.mrb[0].mxu0
        %v1308 = vadd.f32 %v1221, %v1307
        %v1309 = vpop.f32.mrb[0].mxu0
        %1310 = vmatprep.mubr.bf16.mxu0 0
        %1311 = vmatmul.mubr.bf16.gmra.mrb[0].mxu0 %v1216
        %v1312 = vpop.f32.mrb[0].mxu0
        %v1313 = vadd.f32 %v1221, %v1312
        %v1314 = vpop.f32.mrb[0].mxu0
        %v1315 = vpop.f32.mrb[0].mxu0
        %v1316 = vadd.f32 %v1221, %v1315
        %v1317 = vpop.f32.mrb[0].mxu0
        %1318 = vdwg.mxu0
        %v1319 = vmax.f32 %v1305, 0.0
        %v1320 = vmax.f32 %v1308, 0.0
        %v1321 = vmax.f32 %v1313, 0.0
        %v1322 = vmax.f32 %v1316, 0.0
        %v1323 = vld [vmem:[#allocation2 + $0x240] sm:$0xf]
        %v1324 = vld [vmem:[#allocation2 + $0x244] sm:$0xf]
        %v1325 = vld [vmem:[#allocation2 + $0x248] sm:$0xf]
        %v1326 = vld [vmem:[#allocation2 + $0x24c] sm:$0xf]
        %v1327 = vld [vmem:[#allocation2 + $0x250] sm:$0xf]
        %v1328 = vld [vmem:[#allocation2 + $0x254] sm:$0xf]
        %v1329 = vld [vmem:[#allocation2 + $0x258] sm:$0xf]
        %v1330 = vld [vmem:[#allocation2 + $0x25c] sm:$0xf]
        %v1331 = vld [vmem:[#allocation2 + $0x260] sm:$0xf]
        %v1332 = vld [vmem:[#allocation2 + $0x264] sm:$0xf]
        %v1333 = vld [vmem:[#allocation2 + $0x268] sm:$0xf]
        %v1334 = vld [vmem:[#allocation2 + $0x26c] sm:$0xf]
        %v1335 = vld [vmem:[#allocation2 + $0x270] sm:$0xf]
        %v1336 = vld [vmem:[#allocation2 + $0x274] sm:$0xf]
        %v1337 = vld [vmem:[#allocation2 + $0x278] sm:$0xf]
        %v1338 = vld [vmem:[#allocation2 + $0x27c] sm:$0xf]
        %v1339 = vpack.c.bf16 %v1320, %v1319
        %v1340 = vpack.c.bf16 %v1322, %v1321
        %v1341 = vld [vmem:[%s4 + $0x9] sm:$0x1]
        %v1342 = vlaneseq
        %v1343 = vshrl.u32 %v1342, 7
        %v1344 = vsub.s32 0, %v1343
        %v1345 = vrot.slane %v1341, %v1344
        %v1362 = vunpack.c.l.b16 %v1323
        %v1363 = vunpack.c.l.b16 %v1324
        %v1364 = vunpack.c.l.b16 %v1325
        %v1365 = vunpack.c.l.b16 %v1326
        %v1366 = vunpack.c.l.b16 %v1327
        %v1367 = vunpack.c.l.b16 %v1328
        %v1368 = vunpack.c.l.b16 %v1329
        %v1369 = vunpack.c.l.b16 %v1330
        %v1370 = vunpack.c.l.b16 %v1331
        %v1371 = vunpack.c.l.b16 %v1332
        %v1372 = vunpack.c.l.b16 %v1333
        %v1373 = vunpack.c.l.b16 %v1334
        %v1374 = vunpack.c.l.b16 %v1335
        %v1375 = vunpack.c.l.b16 %v1336
        %v1376 = vunpack.c.l.b16 %v1337
        %v1377 = vunpack.c.l.b16 %v1338
        %v1378 = vpack.c.b16 %v1363, %v1362
        %v1379 = vpack.c.b16 %v1365, %v1364
        %v1380 = vpack.c.b16 %v1367, %v1366
        %v1381 = vpack.c.b16 %v1369, %v1368
        %v1382 = vpack.c.b16 %v1371, %v1370
        %v1383 = vpack.c.b16 %v1373, %v1372
        %v1384 = vpack.c.b16 %v1375, %v1374
        %v1385 = vpack.c.b16 %v1377, %v1376
        %1394 = vmatprep.subr.bf16.mxu0 0
        %1395 = vmatpush1.bf16.msra.mxu0 %v1378
        %1396 = vmatprep.subr.bf16.mxu0 0
        %1397 = vmatpush1.bf16.msra.mxu0 %v1379
        %1398 = vmatprep.subr.bf16.mxu0 0
        %1399 = vmatpush1.bf16.msra.mxu0 %v1380
        %1400 = vmatprep.subr.bf16.mxu0 0
        %1401 = vmatpush1.bf16.msra.mxu0 %v1381
        %1402 = vmatprep.subr.bf16.mxu0 0
        %1403 = vmatpush1.bf16.msra.mxu0 %v1382
        %1404 = vmatprep.subr.bf16.mxu0 0
        %1405 = vmatpush1.bf16.msra.mxu0 %v1383
        %1406 = vmatprep.subr.bf16.mxu0 0
        %1407 = vmatpush1.bf16.msra.mxu0 %v1384
        %1408 = vmatprep.subr.bf16.mxu0 0
        %1409 = vmatpush1.bf16.msra.mxu0 %v1385
        %1410 = vmatprep.subr.bf16.mxu0 0
        %1411 = vmatpush1.bf16.msra.mxu0 0
        %1412 = vmatprep.subr.bf16.mxu0 0
        %1413 = vmatpush1.bf16.msra.mxu0 0
        %1414 = vmatprep.subr.bf16.mxu0 0
        %1415 = vmatpush1.bf16.msra.mxu0 0
        %1416 = vmatprep.subr.bf16.mxu0 0
        %1417 = vmatpush1.bf16.msra.mxu0 0
        %1418 = vmatprep.subr.bf16.mxu0 0
        %1419 = vmatpush1.bf16.msra.mxu0 0
        %1420 = vmatprep.subr.bf16.mxu0 0
        %1421 = vmatpush1.bf16.msra.mxu0 0
        %1422 = vmatprep.subr.bf16.mxu0 0
        %1423 = vmatpush1.bf16.msra.mxu0 0
        %1424 = vmatprep.subr.bf16.mxu0 0
        %1425 = vmatpush1.bf16.msra.mxu0 0
        %1426 = vmatprep.mubr.bf16.mxu0 0
        %1427 = vmatmul.mubr.bf16.gmra.mrb[0].mxu0 %v1339
        %v1428 = vpop.f32.mrb[0].mxu0
        %v1429 = vadd.f32 %v1345, %v1428
        %v1430 = vpop.f32.mrb[0].mxu0
        %v1431 = vpop.f32.mrb[0].mxu0
        %v1432 = vadd.f32 %v1345, %v1431
        %v1433 = vpop.f32.mrb[0].mxu0
        %1434 = vmatprep.mubr.bf16.mxu0 0
        %1435 = vmatmul.mubr.bf16.gmra.mrb[0].mxu0 %v1340
        %v1436 = vpop.f32.mrb[0].mxu0
        %v1437 = vadd.f32 %v1345, %v1436
        %v1438 = vpop.f32.mrb[0].mxu0
        %v1439 = vpop.f32.mrb[0].mxu0
        %v1440 = vadd.f32 %v1345, %v1439
        %v1441 = vpop.f32.mrb[0].mxu0
        %1442 = vdwg.mxu0
        %v1443 = vmax.f32 %v1429, 0.0
        %v1444 = vmax.f32 %v1432, 0.0
        %v1445 = vmax.f32 %v1437, 0.0
        %v1446 = vmax.f32 %v1440, 0.0
        %v1447 = vld [vmem:[#allocation2 + $0x280] sm:$0xf]
        %v1448 = vld [vmem:[#allocation2 + $0x284] sm:$0xf]
        %v1449 = vld [vmem:[#allocation2 + $0x288] sm:$0xf]
        %v1450 = vld [vmem:[#allocation2 + $0x28c] sm:$0xf]
        %v1451 = vld [vmem:[#allocation2 + $0x290] sm:$0xf]
        %v1452 = vld [vmem:[#allocation2 + $0x294] sm:$0xf]
        %v1453 = vld [vmem:[#allocation2 + $0x298] sm:$0xf]
        %v1454 = vld [vmem:[#allocation2 + $0x29c] sm:$0xf]
        %v1455 = vld [vmem:[#allocation2 + $0x2a0] sm:$0xf]
        %v1456 = vld [vmem:[#allocation2 + $0x2a4] sm:$0xf]
        %v1457 = vld [vmem:[#allocation2 + $0x2a8] sm:$0xf]
        %v1458 = vld [vmem:[#allocation2 + $0x2ac] sm:$0xf]
        %v1459 = vld [vmem:[#allocation2 + $0x2b0] sm:$0xf]
        %v1460 = vld [vmem:[#allocation2 + $0x2b4] sm:$0xf]
        %v1461 = vld [vmem:[#allocation2 + $0x2b8] sm:$0xf]
        %v1462 = vld [vmem:[#allocation2 + $0x2bc] sm:$0xf]
        %v1463 = vpack.c.bf16 %v1444, %v1443
        %v1464 = vpack.c.bf16 %v1446, %v1445
        %v1465 = vld [vmem:[%s4 + $0xa] sm:$0x1]
        %v1466 = vlaneseq
        %v1467 = vshrl.u32 %v1466, 7
        %v1468 = vsub.s32 0, %v1467
        %v1469 = vrot.slane %v1465, %v1468
        %v1486 = vunpack.c.l.b16 %v1447
        %v1487 = vunpack.c.l.b16 %v1448
        %v1488 = vunpack.c.l.b16 %v1449
        %v1489 = vunpack.c.l.b16 %v1450
        %v1490 = vunpack.c.l.b16 %v1451
        %v1491 = vunpack.c.l.b16 %v1452
        %v1492 = vunpack.c.l.b16 %v1453
        %v1493 = vunpack.c.l.b16 %v1454
        %v1494 = vunpack.c.l.b16 %v1455
        %v1495 = vunpack.c.l.b16 %v1456
        %v1496 = vunpack.c.l.b16 %v1457
        %v1497 = vunpack.c.l.b16 %v1458
        %v1498 = vunpack.c.l.b16 %v1459
        %v1499 = vunpack.c.l.b16 %v1460
        %v1500 = vunpack.c.l.b16 %v1461
        %v1501 = vunpack.c.l.b16 %v1462
        %v1502 = vpack.c.b16 %v1487, %v1486
        %v1503 = vpack.c.b16 %v1489, %v1488
        %v1504 = vpack.c.b16 %v1491, %v1490
        %v1505 = vpack.c.b16 %v1493, %v1492
        %v1506 = vpack.c.b16 %v1495, %v1494
        %v1507 = vpack.c.b16 %v1497, %v1496
        %v1508 = vpack.c.b16 %v1499, %v1498
        %v1509 = vpack.c.b16 %v1501, %v1500
        %1518 = vmatprep.subr.bf16.mxu0 0
        %1519 = vmatpush1.bf16.msra.mxu0 %v1502
        %1520 = vmatprep.subr.bf16.mxu0 0
        %1521 = vmatpush1.bf16.msra.mxu0 %v1503
        %1522 = vmatprep.subr.bf16.mxu0 0
        %1523 = vmatpush1.bf16.msra.mxu0 %v1504
        %1524 = vmatprep.subr.bf16.mxu0 0
        %1525 = vmatpush1.bf16.msra.mxu0 %v1505
        %1526 = vmatprep.subr.bf16.mxu0 0
        %1527 = vmatpush1.bf16.msra.mxu0 %v1506
        %1528 = vmatprep.subr.bf16.mxu0 0
        %1529 = vmatpush1.bf16.msra.mxu0 %v1507
        %1530 = vmatprep.subr.bf16.mxu0 0
        %1531 = vmatpush1.bf16.msra.mxu0 %v1508
        %1532 = vmatprep.subr.bf16.mxu0 0
        %1533 = vmatpush1.bf16.msra.mxu0 %v1509
        %1534 = vmatprep.subr.bf16.mxu0 0
        %1535 = vmatpush1.bf16.msra.mxu0 0
        %1536 = vmatprep.subr.bf16.mxu0 0
        %1537 = vmatpush1.bf16.msra.mxu0 0
        %1538 = vmatprep.subr.bf16.mxu0 0
        %1539 = vmatpush1.bf16.msra.mxu0 0
        %1540 = vmatprep.subr.bf16.mxu0 0
        %1541 = vmatpush1.bf16.msra.mxu0 0
        %1542 = vmatprep.subr.bf16.mxu0 0
        %1543 = vmatpush1.bf16.msra.mxu0 0
        %1544 = vmatprep.subr.bf16.mxu0 0
        %1545 = vmatpush1.bf16.msra.mxu0 0
        %1546 = vmatprep.subr.bf16.mxu0 0
        %1547 = vmatpush1.bf16.msra.mxu0 0
        %1548 = vmatprep.subr.bf16.mxu0 0
        %1549 = vmatpush1.bf16.msra.mxu0 0
        %1550 = vmatprep.mubr.bf16.mxu0 0
        %1551 = vmatmul.mubr.bf16.gmra.mrb[0].mxu0 %v1463
        %v1552 = vpop.f32.mrb[0].mxu0
        %v1553 = vadd.f32 %v1469, %v1552
        %v1554 = vpop.f32.mrb[0].mxu0
        %v1555 = vpop.f32.mrb[0].mxu0
        %v1556 = vadd.f32 %v1469, %v1555
        %v1557 = vpop.f32.mrb[0].mxu0
        %1558 = vmatprep.mubr.bf16.mxu0 0
        %1559 = vmatmul.mubr.bf16.gmra.mrb[0].mxu0 %v1464
        %v1560 = vpop.f32.mrb[0].mxu0
        %v1561 = vadd.f32 %v1469, %v1560
        %v1562 = vpop.f32.mrb[0].mxu0
        %v1563 = vpop.f32.mrb[0].mxu0
        %v1564 = vadd.f32 %v1469, %v1563
        %v1565 = vpop.f32.mrb[0].mxu0
        %1566 = vdwg.mxu0
        %v1567 = vld [vmem:[#allocation2 + $0x2c0] sm:$0xf]
        %v1568 = vld [vmem:[#allocation2 + $0x2c4] sm:$0xf]
        %v1569 = vld [vmem:[#allocation2 + $0x2c8] sm:$0xf]
        %v1570 = vld [vmem:[#allocation2 + $0x2cc] sm:$0xf]
        %v1571 = vld [vmem:[#allocation2 + $0x2d0] sm:$0xf]
        %v1572 = vld [vmem:[#allocation2 + $0x2d4] sm:$0xf]
        %v1573 = vld [vmem:[#allocation2 + $0x2d8] sm:$0xf]
        %v1574 = vld [vmem:[#allocation2 + $0x2dc] sm:$0xf]
        %v1575 = vld [vmem:[#allocation2 + $0x2e0] sm:$0xf]
        %v1576 = vld [vmem:[#allocation2 + $0x2e4] sm:$0xf]
        %v1577 = vld [vmem:[#allocation2 + $0x2e8] sm:$0xf]
        %v1578 = vld [vmem:[#allocation2 + $0x2ec] sm:$0xf]
        %v1579 = vld [vmem:[#allocation2 + $0x2f0] sm:$0xf]
        %v1580 = vld [vmem:[#allocation2 + $0x2f4] sm:$0xf]
        %v1581 = vld [vmem:[#allocation2 + $0x2f8] sm:$0xf]
        %v1582 = vld [vmem:[#allocation2 + $0x2fc] sm:$0xf]
        %v1583 = vld [vmem:[%s4 + $0xb] sm:$0x1]
        %v1584 = vlaneseq
        %v1585 = vshrl.u32 %v1584, 7
        %v1586 = vsub.s32 0, %v1585
        %v1587 = vrot.slane %v1583, %v1586
        %v1604 = vunpack.c.l.b16 %v1567
        %v1605 = vunpack.c.l.b16 %v1568
        %v1606 = vunpack.c.l.b16 %v1569
        %v1607 = vunpack.c.l.b16 %v1570
        %v1608 = vunpack.c.l.b16 %v1571
        %v1609 = vunpack.c.l.b16 %v1572
        %v1610 = vunpack.c.l.b16 %v1573
        %v1611 = vunpack.c.l.b16 %v1574
        %v1612 = vunpack.c.l.b16 %v1575
        %v1613 = vunpack.c.l.b16 %v1576
        %v1614 = vunpack.c.l.b16 %v1577
        %v1615 = vunpack.c.l.b16 %v1578
        %v1616 = vunpack.c.l.b16 %v1579
        %v1617 = vunpack.c.l.b16 %v1580
        %v1618 = vunpack.c.l.b16 %v1581
        %v1619 = vunpack.c.l.b16 %v1582
        %v1620 = vpack.c.b16 %v1605, %v1604
        %v1621 = vpack.c.b16 %v1607, %v1606
        %v1622 = vpack.c.b16 %v1609, %v1608
        %v1623 = vpack.c.b16 %v1611, %v1610
        %v1624 = vpack.c.b16 %v1613, %v1612
        %v1625 = vpack.c.b16 %v1615, %v1614
        %v1626 = vpack.c.b16 %v1617, %v1616
        %v1627 = vpack.c.b16 %v1619, %v1618
        %1636 = vmatprep.subr.bf16.mxu0 0
        %1637 = vmatpush1.bf16.msra.mxu0 %v1620
        %1638 = vmatprep.subr.bf16.mxu0 0
        %1639 = vmatpush1.bf16.msra.mxu0 %v1621
        %1640 = vmatprep.subr.bf16.mxu0 0
        %1641 = vmatpush1.bf16.msra.mxu0 %v1622
        %1642 = vmatprep.subr.bf16.mxu0 0
        %1643 = vmatpush1.bf16.msra.mxu0 %v1623
        %1644 = vmatprep.subr.bf16.mxu0 0
        %1645 = vmatpush1.bf16.msra.mxu0 %v1624
        %1646 = vmatprep.subr.bf16.mxu0 0
        %1647 = vmatpush1.bf16.msra.mxu0 %v1625
        %1648 = vmatprep.subr.bf16.mxu0 0
        %1649 = vmatpush1.bf16.msra.mxu0 %v1626
        %1650 = vmatprep.subr.bf16.mxu0 0
        %1651 = vmatpush1.bf16.msra.mxu0 %v1627
        %1652 = vmatprep.subr.bf16.mxu0 0
        %1653 = vmatpush1.bf16.msra.mxu0 0
        %1654 = vmatprep.subr.bf16.mxu0 0
        %1655 = vmatpush1.bf16.msra.mxu0 0
        %1656 = vmatprep.subr.bf16.mxu0 0
        %1657 = vmatpush1.bf16.msra.mxu0 0
        %1658 = vmatprep.subr.bf16.mxu0 0
        %1659 = vmatpush1.bf16.msra.mxu0 0
        %1660 = vmatprep.subr.bf16.mxu0 0
        %1661 = vmatpush1.bf16.msra.mxu0 0
        %1662 = vmatprep.subr.bf16.mxu0 0
        %1663 = vmatpush1.bf16.msra.mxu0 0
        %1664 = vmatprep.subr.bf16.mxu0 0
        %1665 = vmatpush1.bf16.msra.mxu0 0
        %1666 = vmatprep.subr.bf16.mxu0 0
        %1667 = vmatpush1.bf16.msra.mxu0 0
        %1668 = vmatprep.mubr.bf16.mxu0 0
        %1669 = vmatmul.mubr.bf16.gmra.mrb[0].mxu0 %v1463
        %v1670 = vpop.f32.mrb[0].mxu0
        %v1671 = vadd.f32 %v1587, %v1670
        %v1672 = vpop.f32.mrb[0].mxu0
        %v1673 = vpop.f32.mrb[0].mxu0
        %v1674 = vadd.f32 %v1587, %v1673
        %v1675 = vpop.f32.mrb[0].mxu0
        %1676 = vmatprep.mubr.bf16.mxu0 0
        %1677 = vmatmul.mubr.bf16.gmra.mrb[0].mxu0 %v1464
        %v1678 = vpop.f32.mrb[0].mxu0
        %v1679 = vadd.f32 %v1587, %v1678
        %v1680 = vpop.f32.mrb[0].mxu0
        %v1681 = vpop.f32.mrb[0].mxu0
        %v1682 = vadd.f32 %v1587, %v1681
        %v1683 = vpop.f32.mrb[0].mxu0
        %1684 = vdwg.mxu0
        %1685 = vst [vmem:[%s265] sm:$0xff] %v1043
        %1686 = vst [vmem:[%s265 + $0x20] sm:$0xff] %v1046
        %1687 = vst [vmem:[%s265 + $0x40] sm:$0xff] %v1051
        %1688 = vst [vmem:[%s265 + $0x60] sm:$0xff] %v1054
        %1689 = vst [vmem:[%s265 + $0x8] sm:$0xff] %v1161
        %1690 = vst [vmem:[%s265 + $0x28] sm:$0xff] %v1164
        %1691 = vst [vmem:[%s265 + $0x48] sm:$0xff] %v1169
        %1692 = vst [vmem:[%s265 + $0x68] sm:$0xff] %v1172
        %1693 = vst [vmem:[%s265 + $0x10] sm:$0xff] %v1553
        %1694 = vst [vmem:[%s265 + $0x30] sm:$0xff] %v1556
        %1695 = vst [vmem:[%s265 + $0x50] sm:$0xff] %v1561
        %1696 = vst [vmem:[%s265 + $0x70] sm:$0xff] %v1564
        %1697 = vst [vmem:[%s265 + $0x18] sm:$0xff] %v1671
        %1698 = vst [vmem:[%s265 + $0x38] sm:$0xff] %v1674
        %1699 = vst [vmem:[%s265 + $0x58] sm:$0xff] %v1679
        %1700 = vst [vmem:[%s265 + $0x78] sm:$0xff] %v1682
        %s1701 = sand.u32 %s148, 1
        %s1702 = scalar_lea.sflag [#allocation4], %s1701
        %s1703 = sand.u32 %s148, 1
        %s1704 = smul.addr %s1703, 128
        %s1705 = scalar_lea.vmem [#allocation5], %s1704
        // Predicated region
        $region45: #{tpu_custom_call.1} parent=39 // pred_check
          %p1706 = pneg %p158
        $region46: #{tpu_custom_call.1} parent=39 // pred_check_branch
          %1708 = sbr.rel (%p1706) target = $region48
        $region47: #{tpu_custom_call.1} parent=39 // pred_region
          %s1709 = smul.u32 4, %s20
          %s1711 = ssub.s32 2048, 2048
          %1712 = vsyncadd %s1702, %s1711
          %s1713 = smul.addr %s1709, 4
          %s1714 = smul.addr %s1713, 128
          %s1715 = scalar_lea.hbm %s5, %s1714
          %s1716 = sshll.u32 %s1705, 4
          %s1717 = int_to_ptr.vmem [resolvable:$true] %s1716
          %1722 = dma.vmem_to_hbm [thread:$0]  %s1717, 2048, %s1715, %s1702, 512, 512, 32
        $region48: #{tpu_custom_call.1} parent=39 // pred_fallthru
          _
      $region40: #{tpu_custom_call.1} parent=5 // pred_fallthru
        _
      %p1723 = scmp.le.s32.totalorder 2, %s15
      // Predicated region
      $region49: #{tpu_custom_call.1} parent=5 // pred_check
        %p1724 = pneg %p1723
      $region50: #{tpu_custom_call.1} parent=5 // pred_check_branch
        %1726 = sbr.rel (%p1724) target = $region52
      $region51: #{tpu_custom_call.1} parent=5 // pred_region
        %s1727 = ssub.s32 %s15, 2
        // Predicated region
        $region53: #{tpu_custom_call.1} parent=51 // pred_check
          %p1728 = pneg %p164
        $region54: #{tpu_custom_call.1} parent=51 // pred_check_branch
          %1730 = sbr.rel (%p1728) target = $region56
        $region55: #{tpu_custom_call.1} parent=51 // pred_region
          %s1731 = sand.u32 %s149, 1
          %s1732 = scalar_lea.sflag [#allocation4], %s1731
          %s1733 = sand.u32 %s149, 1
          %s1734 = smul.addr %s1733, 128
          %s1735 = scalar_lea.vmem [#allocation5], %s1734
          %1736 = dma.done %s1732, 2048
        $region56: #{tpu_custom_call.1} parent=51 // pred_fallthru
          _
      $region52: #{tpu_custom_call.1} parent=5 // pred_fallthru
        _
    $region6: #{tpu_custom_call.1} parent=1 // loop_footer
      %s19 = sadd.s32 1, %s15
    $region7: #{tpu_custom_call.1} parent=1 // loop_footer_branch
      %14 = sbr.rel target = $region3
    $region8: #{tpu_custom_call.1} parent=1 // loop_exit
      _
    %1737 = vsyncpa [#allocation3], 1
    %s1738 = scalar_lea.sflag [#allocation3], 1
    %1739 = vsyncpa %s1738, 1
    %1740 = vsyncpa [#allocation4], 1
    %s1741 = scalar_lea.sflag [#allocation4], 1
    %1742 = vsyncpa %s1741, 1

</llo_original>
